<compile_context>
chip_gen: v7x
topology: tpu7x:2x2x1
jax: 0.10.0
libtpu: 0.0.40
codegen_flags: <defaults>
</compile_context>

<pallas_src>
import jax
import jax.numpy as jnp
from jax.experimental import pallas as pl
from jax.experimental.pallas import tpu as pltpu

BN_EPS = 1e-5


def projection_head_kernel(pooled_ref, w1_ref, b1_ref, gamma_ref, beta_ref,
                           w2_ref, b2_ref, out_ref):
    # pooled_ref: (B, C) f32          w1_ref: (C, H1) f32
    # b1/gamma/beta: (1, H1) f32      w2_ref: (H1, tn) bf16
    # b2_ref: (1, tn) f32             out_ref: (B, tn) f32
    pooled = pooled_ref[...]                       # (B, C)
    w1 = w1_ref[...]                               # (C, H1)
    C = w1.shape[0]
    B = pooled.shape[0]

    # --- fc1 on the VPU: C broadcast-FMAs (avoids an M=2, K=4 MXU round-trip) ---
    h = pooled[:, 0:1] * w1[0:1, :]                # (B, H1)
    for c in range(1, C):
        h = h + pooled[:, c:c + 1] * w1[c:c + 1, :]
    h = h + b1_ref[...]

    # --- BatchNorm1d, training mode (biased batch statistics, eps=1e-5) ---
    inv_b = 1.0 / B
    mean = jnp.sum(h, axis=0, keepdims=True) * inv_b        # (1, H1)
    centered = h - mean
    var = jnp.sum(centered * centered, axis=0, keepdims=True) * inv_b
    scale = gamma_ref[...] * jax.lax.rsqrt(var + BN_EPS)    # gamma folded into rsqrt
    h_act = jnp.maximum(centered * scale + beta_ref[...], 0.0)   # ReLU

    # --- fc2 for this output tile: bf16 operands, f32 accumulation on the MXU ---
    out_ref[...] = (jnp.dot(h_act.astype(w2_ref.dtype), w2_ref[...],
                            preferred_element_type=jnp.float32)
                    + b2_ref[...]).astype(out_ref.dtype)


def projection_head(x_nchw, w1, b1, gamma, beta, w2, b2, *, tn=256):
    """x_nchw: (B, C, H, W) f32.  Weights given already transposed (x @ W + b).
    Returns (B, out_dim) f32."""
    B, C, H, W = x_nchw.shape
    H1 = w1.shape[1]
    O = w2.shape[1]
    if tn > O or O % tn != 0:
        tn = O  # fall back to a single output tile for awkward widths

    # Wrapper glue: global average pool (AdaptiveAvgPool2d(1) + flatten).
    pooled = jnp.mean(x_nchw, axis=(2, 3))         # (B, C) f32

    # Stream the dominant weight in bf16; accumulation stays f32 in-kernel.
    w2_bf16 = w2.astype(jnp.bfloat16)

    n_tiles = O // tn
    f32 = 4
    bytes_accessed = (B * C * f32 + C * H1 * f32 + 3 * H1 * f32
                      + H1 * O * 2 + O * f32 + B * O * f32)
    cost = pl.CostEstimate(
        # fc2 (total) + per-tile recompute of the fc1/BN/ReLU prologue.
        flops=2 * B * H1 * O + n_tiles * (2 * B * C * H1 + 10 * B * H1),
        transcendentals=H1 * n_tiles,              # rsqrt per feature per tile
        bytes_accessed=bytes_accessed)

    return pl.pallas_call(
        projection_head_kernel,
        out_shape=jax.ShapeDtypeStruct((B, O), jnp.float32),
        grid_spec=pltpu.PrefetchScalarGridSpec(
            num_scalar_prefetch=0,
            grid=(n_tiles,),
            in_specs=[
                pl.BlockSpec((B, C), lambda j: (0, 0)),      # pooled (resident)
                pl.BlockSpec((C, H1), lambda j: (0, 0)),     # w1     (resident)
                pl.BlockSpec((1, H1), lambda j: (0, 0)),     # b1
                pl.BlockSpec((1, H1), lambda j: (0, 0)),     # gamma
                pl.BlockSpec((1, H1), lambda j: (0, 0)),     # beta
                pl.BlockSpec((H1, tn), lambda j: (0, j)),    # w2 tile (streamed)
                pl.BlockSpec((1, tn), lambda j: (0, j)),     # b2 tile
            ],
            out_specs=pl.BlockSpec((B, tn), lambda j: (0, j)),
        ),
        compiler_params=pltpu.CompilerParams(
            # grid=(2,): v7x runs one 256-wide tile per TensorCore; v5e/v6e keep
            # the w2 stream overlapped across the two steps.
            dimension_semantics=("parallel",)),
        cost_estimate=cost,
    )(pooled, w1, b1.reshape(1, H1), gamma.reshape(1, H1),
      beta.reshape(1, H1), w2_bf16, b2.reshape(1, O))


def reference(x_nchw, w1, b1, gamma, beta, w2, b2):
    pooled = jnp.mean(x_nchw, axis=(2, 3))
    h = pooled @ w1 + b1
    mean = jnp.mean(h, axis=0, keepdims=True)
    var = jnp.mean((h - mean) ** 2, axis=0, keepdims=True)
    h = (h - mean) / jnp.sqrt(var + BN_EPS) * gamma + beta
    h = jnp.maximum(h, 0.0)
    return h @ w2 + b2


if __name__ == "__main__":
    # Small shapes consistent with the module: in_dim = C = 4, hidden = 1024, out = 512
    B, C, H, W = 2, 4, 16, 16
    HIDDEN, OUT = 1024, 512

    key = jax.random.PRNGKey(0)
    kx, k1, kb1, k2, kb2 = jax.random.split(key, 5)

    x = jax.random.normal(kx, (B, C, H, W), dtype=jnp.float32)

    # Deterministic param init (PyTorch-Linear-style uniform bounds), stored
    # already transposed so the kernel computes x @ W + b.
    bound1 = 1.0 / (C ** 0.5)
    w1 = jax.random.uniform(k1, (C, HIDDEN), jnp.float32, -bound1, bound1)
    b1 = jax.random.uniform(kb1, (HIDDEN,), jnp.float32, -bound1, bound1)

    gamma = jnp.ones((HIDDEN,), jnp.float32)   # BatchNorm1d weight init
    beta = jnp.zeros((HIDDEN,), jnp.float32)   # BatchNorm1d bias init

    bound2 = 1.0 / (HIDDEN ** 0.5)
    w2 = jax.random.uniform(k2, (HIDDEN, OUT), jnp.float32, -bound2, bound2)
    b2 = jax.random.uniform(kb2, (OUT,), jnp.float32, -bound2, bound2)

    out = projection_head(x, w1, b1, gamma, beta, w2, b2)
    out = jax.block_until_ready(out)

    ref = reference(x, w1, b1, gamma, beta, w2, b2)
    assert out.shape == (B, OUT)
    # Tolerance loosened slightly vs a pure-f32 version since w2 (and the fc2
    # activation operand) are bf16; accumulation remains f32.
    assert jnp.allclose(out, ref, atol=2e-2, rtol=2e-2), "mismatch vs JAX reference"

    print("KERNEL_OK")
</pallas_src>

<mosaic_0001>
module attributes {stable_mosaic.version = 11 : i64} {
  func.func @projection_head_kernel(%arg0: i32, %arg1: memref<2x4xf32, #tpu.memory_space<vmem>>, %arg2: memref<4x1024xf32, #tpu.memory_space<vmem>>, %arg3: memref<1x1024xf32, #tpu.memory_space<vmem>>, %arg4: memref<1x1024xf32, #tpu.memory_space<vmem>>, %arg5: memref<1x1024xf32, #tpu.memory_space<vmem>>, %arg6: memref<1024x256xbf16, #tpu.memory_space<vmem>>, %arg7: memref<1x256xf32, #tpu.memory_space<vmem>>, %arg8: memref<2x256xf32, #tpu.memory_space<vmem>>) attributes {dimension_semantics = [#tpu.dimension_semantics<parallel>], iteration_bounds = array<i64: 2>, scalar_prefetch = 0 : i64, scratch_operands = 0 : i64, tpu.core_type = #tpu.core_type<tc>, window_params = [{pipeline_mode = #tpu.pipeline_mode<synchronous>, transform_indices = @transform_0, window_bounds = array<i64: 2, 4>}, {pipeline_mode = #tpu.pipeline_mode<synchronous>, transform_indices = @transform_1, window_bounds = array<i64: 4, 1024>}, {pipeline_mode = #tpu.pipeline_mode<synchronous>, transform_indices = @transform_2, window_bounds = array<i64: 1, 1024>}, {pipeline_mode = #tpu.pipeline_mode<synchronous>, transform_indices = @transform_3, window_bounds = array<i64: 1, 1024>}, {pipeline_mode = #tpu.pipeline_mode<synchronous>, transform_indices = @transform_4, window_bounds = array<i64: 1, 1024>}, {transform_indices = @transform_5, window_bounds = array<i64: 1024, 256>}, {transform_indices = @transform_6, window_bounds = array<i64: 1, 256>}, {transform_indices = @transform_7, window_bounds = array<i64: 2, 256>}]} {
    %c0 = arith.constant 0 : index
    %c0_0 = arith.constant 0 : index
    %0 = vector.load %arg1[%c0, %c0_0] : memref<2x4xf32, #tpu.memory_space<vmem>>, vector<2x4xf32>
    %c0_1 = arith.constant 0 : index
    %c0_2 = arith.constant 0 : index
    %1 = vector.load %arg2[%c0_1, %c0_2] : memref<4x1024xf32, #tpu.memory_space<vmem>>, vector<4x1024xf32>
    %2 = vector.extract_strided_slice %0 {offsets = [0, 0], sizes = [2, 1], strides = [1, 1]} : vector<2x4xf32> to vector<2x1xf32>
    %3 = vector.extract_strided_slice %1 {offsets = [0, 0], sizes = [1, 1024], strides = [1, 1]} : vector<4x1024xf32> to vector<1x1024xf32>
    %4 = vector.broadcast %2 : vector<2x1xf32> to vector<2x1024xf32>
    %5 = vector.broadcast %3 : vector<1x1024xf32> to vector<2x1024xf32>
    %6 = arith.mulf %4, %5 : vector<2x1024xf32>
    %7 = vector.extract_strided_slice %0 {offsets = [0, 1], sizes = [2, 1], strides = [1, 1]} : vector<2x4xf32> to vector<2x1xf32>
    %8 = vector.extract_strided_slice %1 {offsets = [1, 0], sizes = [1, 1024], strides = [1, 1]} : vector<4x1024xf32> to vector<1x1024xf32>
    %9 = vector.broadcast %7 : vector<2x1xf32> to vector<2x1024xf32>
    %10 = vector.broadcast %8 : vector<1x1024xf32> to vector<2x1024xf32>
    %11 = arith.mulf %9, %10 : vector<2x1024xf32>
    %12 = arith.addf %6, %11 : vector<2x1024xf32>
    %13 = vector.extract_strided_slice %0 {offsets = [0, 2], sizes = [2, 1], strides = [1, 1]} : vector<2x4xf32> to vector<2x1xf32>
    %14 = vector.extract_strided_slice %1 {offsets = [2, 0], sizes = [1, 1024], strides = [1, 1]} : vector<4x1024xf32> to vector<1x1024xf32>
    %15 = vector.broadcast %13 : vector<2x1xf32> to vector<2x1024xf32>
    %16 = vector.broadcast %14 : vector<1x1024xf32> to vector<2x1024xf32>
    %17 = arith.mulf %15, %16 : vector<2x1024xf32>
    %18 = arith.addf %12, %17 : vector<2x1024xf32>
    %19 = vector.extract_strided_slice %0 {offsets = [0, 3], sizes = [2, 1], strides = [1, 1]} : vector<2x4xf32> to vector<2x1xf32>
    %20 = vector.extract_strided_slice %1 {offsets = [3, 0], sizes = [1, 1024], strides = [1, 1]} : vector<4x1024xf32> to vector<1x1024xf32>
    %21 = vector.broadcast %19 : vector<2x1xf32> to vector<2x1024xf32>
    %22 = vector.broadcast %20 : vector<1x1024xf32> to vector<2x1024xf32>
    %23 = arith.mulf %21, %22 : vector<2x1024xf32>
    %24 = arith.addf %18, %23 : vector<2x1024xf32>
    %c0_3 = arith.constant 0 : index
    %c0_4 = arith.constant 0 : index
    %25 = vector.load %arg3[%c0_3, %c0_4] : memref<1x1024xf32, #tpu.memory_space<vmem>>, vector<1x1024xf32>
    %26 = vector.broadcast %25 : vector<1x1024xf32> to vector<2x1024xf32>
    %27 = arith.addf %24, %26 : vector<2x1024xf32>
    %cst = arith.constant dense<0.000000e+00> : vector<1024xf32>
    %28 = vector.multi_reduction <add>, %27, %cst [0] : vector<2x1024xf32> to vector<1024xf32>
    %29 = vector.shape_cast %28 : vector<1024xf32> to vector<1x1024xf32>
    %cst_5 = arith.constant 5.000000e-01 : f32
    %30 = vector.broadcast %cst_5 : f32 to vector<1x1024xf32>
    %31 = arith.mulf %29, %30 : vector<1x1024xf32>
    %32 = vector.broadcast %31 : vector<1x1024xf32> to vector<2x1024xf32>
    %33 = arith.subf %27, %32 : vector<2x1024xf32>
    %34 = arith.mulf %33, %33 : vector<2x1024xf32>
    %cst_6 = arith.constant dense<0.000000e+00> : vector<1024xf32>
    %35 = vector.multi_reduction <add>, %34, %cst_6 [0] : vector<2x1024xf32> to vector<1024xf32>
    %36 = vector.shape_cast %35 : vector<1024xf32> to vector<1x1024xf32>
    %cst_7 = arith.constant 5.000000e-01 : f32
    %37 = vector.broadcast %cst_7 : f32 to vector<1x1024xf32>
    %38 = arith.mulf %36, %37 : vector<1x1024xf32>
    %c0_8 = arith.constant 0 : index
    %c0_9 = arith.constant 0 : index
    %39 = vector.load %arg4[%c0_8, %c0_9] : memref<1x1024xf32, #tpu.memory_space<vmem>>, vector<1x1024xf32>
    %cst_10 = arith.constant 9.99999974E-6 : f32
    %40 = vector.broadcast %cst_10 : f32 to vector<1x1024xf32>
    %41 = arith.addf %38, %40 : vector<1x1024xf32>
    %42 = math.rsqrt %41 : vector<1x1024xf32>
    %43 = arith.mulf %39, %42 : vector<1x1024xf32>
    %44 = vector.broadcast %43 : vector<1x1024xf32> to vector<2x1024xf32>
    %45 = arith.mulf %33, %44 : vector<2x1024xf32>
    %c0_11 = arith.constant 0 : index
    %c0_12 = arith.constant 0 : index
    %46 = vector.load %arg5[%c0_11, %c0_12] : memref<1x1024xf32, #tpu.memory_space<vmem>>, vector<1x1024xf32>
    %47 = vector.broadcast %46 : vector<1x1024xf32> to vector<2x1024xf32>
    %48 = arith.addf %45, %47 : vector<2x1024xf32>
    %cst_13 = arith.constant 0.000000e+00 : f32
    %49 = vector.broadcast %cst_13 : f32 to vector<2x1024xf32>
    %50 = arith.maximumf %48, %49 : vector<2x1024xf32>
    %51 = arith.truncf %50 : vector<2x1024xf32> to vector<2x1024xbf16>
    %c0_14 = arith.constant 0 : index
    %c0_15 = arith.constant 0 : index
    %52 = vector.load %arg6[%c0_14, %c0_15] : memref<1024x256xbf16, #tpu.memory_space<vmem>>, vector<1024x256xbf16>
    %cst_16 = arith.constant dense<0.000000e+00> : vector<2x256xf32>
    %53 = tpu.matmul %51, %52, %cst_16 {dimension_numbers = #tpu.dot_dimension_numbers<[1], [0], [0], [1], [0, 0, 1, 1], [], []>} : vector<2x1024xbf16>, vector<1024x256xbf16>, vector<2x256xf32> -> vector<2x256xf32>
    %c0_17 = arith.constant 0 : index
    %c0_18 = arith.constant 0 : index
    %54 = vector.load %arg7[%c0_17, %c0_18] : memref<1x256xf32, #tpu.memory_space<vmem>>, vector<1x256xf32>
    %55 = vector.broadcast %54 : vector<1x256xf32> to vector<2x256xf32>
    %56 = arith.addf %53, %55 : vector<2x256xf32>
    %c0_19 = arith.constant 0 : index
    %c0_20 = arith.constant 0 : index
    %57 = vector.load %arg8[%c0_19, %c0_20] : memref<2x256xf32, #tpu.memory_space<vmem>>, vector<2x256xf32>
    tpu.vector_store %arg8[%c0_19, %c0_20], %56 {strides = array<i32>} : memref<2x256xf32, #tpu.memory_space<vmem>>, vector<2x256xf32>,
    return
  }
  func.func @transform_0(%arg0: i32) -> (i32, i32) {
    %c0_i32 = arith.constant 0 : i32
    %c0_i32_0 = arith.constant 0 : i32
    %c0_i32_1 = arith.constant 0 : i32
    return %c0_i32, %c0_i32_0 : i32, i32
  }
  func.func @transform_1(%arg0: i32) -> (i32, i32) {
    %c0_i32 = arith.constant 0 : i32
    %c0_i32_0 = arith.constant 0 : i32
    %c0_i32_1 = arith.constant 0 : i32
    return %c0_i32, %c0_i32_0 : i32, i32
  }
  func.func @transform_2(%arg0: i32) -> (i32, i32) {
    %c0_i32 = arith.constant 0 : i32
    %c0_i32_0 = arith.constant 0 : i32
    %c0_i32_1 = arith.constant 0 : i32
    return %c0_i32, %c0_i32_0 : i32, i32
  }
  func.func @transform_3(%arg0: i32) -> (i32, i32) {
    %c0_i32 = arith.constant 0 : i32
    %c0_i32_0 = arith.constant 0 : i32
    %c0_i32_1 = arith.constant 0 : i32
    return %c0_i32, %c0_i32_0 : i32, i32
  }
  func.func @transform_4(%arg0: i32) -> (i32, i32) {
    %c0_i32 = arith.constant 0 : i32
    %c0_i32_0 = arith.constant 0 : i32
    %c0_i32_1 = arith.constant 0 : i32
    return %c0_i32, %c0_i32_0 : i32, i32
  }
  func.func @transform_5(%arg0: i32) -> (i32, i32) {
    %c0_i32 = arith.constant 0 : i32
    %c0_i32_0 = arith.constant 0 : i32
    return %c0_i32, %arg0 : i32, i32
  }
  func.func @transform_6(%arg0: i32) -> (i32, i32) {
    %c0_i32 = arith.constant 0 : i32
    %c0_i32_0 = arith.constant 0 : i32
    return %c0_i32, %arg0 : i32, i32
  }
  func.func @transform_7(%arg0: i32) -> (i32, i32) {
    %c0_i32 = arith.constant 0 : i32
    %c0_i32_0 = arith.constant 0 : i32
    return %c0_i32, %arg0 : i32, i32
  }
}

</mosaic_0001>

<llo_original>
// kernel: tpu_custom_call.1
$region0: #{tpu_custom_call.1}
  #allocation0 [shape = 'u32[]', space=smem, size = 0x4, offset = 0x4, fixed_abs, tag = 'smem constant byte address 0x4 - core index']
  #allocation1 [shape = 'u32[144,128]{1,0:T(1,128)}', space=vmem, size = 0x12000, scoped, tag = 'internal scratch']
  %s0 = inlined_call_operand.hbm [shape: f32[2,4], index: 0, kind: input, shape index: {}]
  %s1 = inlined_call_operand.hbm [shape: f32[4,1024], index: 1, kind: input, shape index: {}]
  %s2 = inlined_call_operand.hbm [shape: f32[1,1024], index: 2, kind: input, shape index: {}]
  %s3 = inlined_call_operand.vmem [shape: f32[1,1024], index: 3, kind: input, shape index: {}]
  %s4 = inlined_call_operand.hbm [shape: f32[1,1024], index: 4, kind: input, shape index: {}]
  %s5 = inlined_call_operand.hbm [shape: bf16[1024,512], index: 5, kind: input, shape index: {}]
  %s6 = inlined_call_operand.vmem [shape: f32[1,512], index: 6, kind: input, shape index: {}]
  %s7 = inlined_call_operand.hbm [shape: f32[2,512], index: 7, kind: output, shape index: {}]
  %s8 = sld [smem:[#allocation0]]
  $region81: #{tpu_custom_call.1} parent=0
    _
  %s10 = ssub.s32 1, %s8
  %s11 = scalar_select 0, %s10, %s8
  $region1: #{tpu_custom_call.1} parent=0
    #allocation2 [shape = 'u8[1024]{0}', space=vmem, size = 0x400, scoped, tag = 'input window, operand 0, single buffered']
    #allocation3 [shape = 's32[2]{0}', space=sflag, size = 0x8, scoped, tag = 'scoped memory for tpu_custom_call.1']
    #allocation4 [shape = 's32[2]{0}', space=sflag, size = 0x8, scoped, tag = 'scoped memory for tpu_custom_call.1']
    #allocation5 [shape = 'u8[16384]{0}', space=vmem, size = 0x4000, scoped, tag = 'input window, operand 1, single buffered']
    #allocation6 [shape = 's32[1]{0}', space=sflag, size = 0x4, scoped, tag = 'scoped memory for tpu_custom_call.1']
    #allocation7 [shape = 'u8[4096]{0}', space=vmem, size = 0x1000, scoped, tag = 'input window, operand 2, single buffered']
    #allocation8 [shape = 'u8[4096]{0}', space=vmem, size = 0x1000, scoped, tag = 'input window, operand 4, single buffered']
    #allocation9 [shape = 's32[1]{0}', space=sflag, size = 0x4, scoped, tag = 'scoped memory for tpu_custom_call.1']
    #allocation10 [shape = 'u8[1048576]{0}', space=vmem, size = 0x100000, scoped, tag = 'input window, operand 5']
    #allocation11 [shape = 'u8[4096]{0}', space=vmem, size = 0x1000, scoped, tag = 'output window, operand 0']
    %12 = vsyncpa [#allocation3], 0
    %13 = vsyncpa [#allocation6], 0
    %14 = vsyncpa [#allocation9], 0
    %15 = vsyncpa [#allocation4], 0
    %s16 = scalar_lea.sflag [#allocation4], 1
    %17 = vsyncpa %s16, 0
    loop: start=0, step=1, limit=4
    $region2: #{tpu_custom_call.1} parent=1 // loop_pre_header
      _
    $region3: #{tpu_custom_call.1} parent=1 // loop_header
      %s19 = sphi 0, %s23
      %p20 = scmp.ge.s32.totalorder %s19, 4
      %s27 = sphi 0, %s27
      %s29 = sphi 0, %s27
      %s30 = sphi 0, %s29
      %s44 = sphi 0, %s30
      %s48 = sphi 0, %s48
      %s50 = sphi 0, %s48
      %s51 = sphi 0, %s50
      %s65 = sphi 0, %s51
      %s69 = sphi 0, %s69
      %s71 = sphi 0, %s69
      %s72 = sphi 0, %s71
      %s86 = sphi 0, %s72
      %s90 = sphi 0, %s90
      %s92 = sphi 0, %s90
      %s93 = sphi 0, %s92
      %s107 = sphi 0, %s93
      %s111 = sphi 0, %s111
      %s113 = sphi 0, %s111
      %s114 = sphi 0, %s113
      %s128 = sphi 0, %s114
      %s134 = sphi 0, %s136
      %s137 = sphi 0, %s134
      %s138 = sphi 0, %s137
      %s154 = sphi 0, %s138
      %s160 = sphi 0, %s162
      %s163 = sphi 0, %s160
      %s164 = sphi 0, %s163
      %s180 = sphi 0, %s164
      %s186 = sphi 0, %s188
      %s189 = sphi 0, %s186
      %s190 = sphi 0, %s189
      %s206 = sphi 0, %s190
    $region4: #{tpu_custom_call.1} parent=1 // loop_header_branch
      %22 = sbr.rel (%p20) target = $region8
    $region5: #{tpu_custom_call.1} parent=1 // loop_body
      %s24 = ssub.s32 %s19, 1
      %s25 = ssub.s32 %s19, 2
      %s26 = sadd.s32 %s19, 1
      %s28 = sadd.s32 %s27, 1
      %p31 = scmp.eq.s32.totalorder %s19, 1
      %p32 = scmp.ne.s32.totalorder %s27, %s29
      %p33 = scmp.eq.s32.totalorder %s19, 0
      %p34 = por %p32, %p33
      %p35 = scmp.ne.s32.totalorder %s27, %s29
      %p36 = scmp.eq.s32.totalorder %s24, 1
      %p37 = por %p35, %p36
      %p38 = scmp.ne.s32.totalorder %s29, %s30
      %p39 = scmp.eq.s32.totalorder %s24, 0
      %p40 = por %p38, %p39
      %p41 = scmp.ne.s32.totalorder %s29, %s30
      %p42 = scmp.eq.s32.totalorder %s25, 1
      %p43 = por %p41, %p42
      %p45 = scmp.ne.s32.totalorder %s30, %s44
      %p46 = scmp.eq.s32.totalorder %s25, 0
      %p47 = por %p45, %p46
      %s49 = sadd.s32 %s48, 1
      %p52 = scmp.eq.s32.totalorder %s19, 1
      %p53 = scmp.ne.s32.totalorder %s48, %s50
      %p54 = scmp.eq.s32.totalorder %s19, 0
      %p55 = por %p53, %p54
      %p56 = scmp.ne.s32.totalorder %s48, %s50
      %p57 = scmp.eq.s32.totalorder %s24, 1
      %p58 = por %p56, %p57
      %p59 = scmp.ne.s32.totalorder %s50, %s51
      %p60 = scmp.eq.s32.totalorder %s24, 0
      %p61 = por %p59, %p60
      %p62 = scmp.ne.s32.totalorder %s50, %s51
      %p63 = scmp.eq.s32.totalorder %s25, 1
      %p64 = por %p62, %p63
      %p66 = scmp.ne.s32.totalorder %s51, %s65
      %p67 = scmp.eq.s32.totalorder %s25, 0
      %p68 = por %p66, %p67
      %s70 = sadd.s32 %s69, 1
      %p73 = scmp.eq.s32.totalorder %s19, 1
      %p74 = scmp.ne.s32.totalorder %s69, %s71
      %p75 = scmp.eq.s32.totalorder %s19, 0
      %p76 = por %p74, %p75
      %p77 = scmp.ne.s32.totalorder %s69, %s71
      %p78 = scmp.eq.s32.totalorder %s24, 1
      %p79 = por %p77, %p78
      %p80 = scmp.ne.s32.totalorder %s71, %s72
      %p81 = scmp.eq.s32.totalorder %s24, 0
      %p82 = por %p80, %p81
      %p83 = scmp.ne.s32.totalorder %s71, %s72
      %p84 = scmp.eq.s32.totalorder %s25, 1
      %p85 = por %p83, %p84
      %p87 = scmp.ne.s32.totalorder %s72, %s86
      %p88 = scmp.eq.s32.totalorder %s25, 0
      %p89 = por %p87, %p88
      %s91 = sadd.s32 %s90, 1
      %p94 = scmp.eq.s32.totalorder %s19, 1
      %p95 = scmp.ne.s32.totalorder %s90, %s92
      %p96 = scmp.eq.s32.totalorder %s19, 0
      %p97 = por %p95, %p96
      %p98 = scmp.ne.s32.totalorder %s90, %s92
      %p99 = scmp.eq.s32.totalorder %s24, 1
      %p100 = por %p98, %p99
      %p101 = scmp.ne.s32.totalorder %s92, %s93
      %p102 = scmp.eq.s32.totalorder %s24, 0
      %p103 = por %p101, %p102
      %p104 = scmp.ne.s32.totalorder %s92, %s93
      %p105 = scmp.eq.s32.totalorder %s25, 1
      %p106 = por %p104, %p105
      %p108 = scmp.ne.s32.totalorder %s93, %s107
      %p109 = scmp.eq.s32.totalorder %s25, 0
      %p110 = por %p108, %p109
      %s112 = sadd.s32 %s111, 1
      %p115 = scmp.eq.s32.totalorder %s19, 1
      %p116 = scmp.ne.s32.totalorder %s111, %s113
      %p117 = scmp.eq.s32.totalorder %s19, 0
      %p118 = por %p116, %p117
      %p119 = scmp.ne.s32.totalorder %s111, %s113
      %p120 = scmp.eq.s32.totalorder %s24, 1
      %p121 = por %p119, %p120
      %p122 = scmp.ne.s32.totalorder %s113, %s114
      %p123 = scmp.eq.s32.totalorder %s24, 0
      %p124 = por %p122, %p123
      %p125 = scmp.ne.s32.totalorder %s113, %s114
      %p126 = scmp.eq.s32.totalorder %s25, 1
      %p127 = por %p125, %p126
      %p129 = scmp.ne.s32.totalorder %s114, %s128
      %p130 = scmp.eq.s32.totalorder %s25, 0
      %p131 = por %p129, %p130
      %s132 = ssub.s32 %s19, %s26
      %p133 = scmp.eq.s32.totalorder %s132, 0
      %s135 = sadd.s32 %s134, 1
      %s136 = scalar_select %p133, %s134, %s135
      %p139 = pneg %p133
      %p140 = scmp.eq.s32.totalorder %s19, 1
      %p141 = por %p139, %p140
      %p142 = scmp.ne.s32.totalorder %s134, %s137
      %p143 = scmp.eq.s32.totalorder %s19, 0
      %p144 = por %p142, %p143
      %p145 = scmp.ne.s32.totalorder %s134, %s137
      %p146 = scmp.eq.s32.totalorder %s24, 1
      %p147 = por %p145, %p146
      %p148 = scmp.ne.s32.totalorder %s137, %s138
      %p149 = scmp.eq.s32.totalorder %s24, 0
      %p150 = por %p148, %p149
      %p151 = scmp.ne.s32.totalorder %s137, %s138
      %p152 = scmp.eq.s32.totalorder %s25, 1
      %p153 = por %p151, %p152
      %p155 = scmp.ne.s32.totalorder %s138, %s154
      %p156 = scmp.eq.s32.totalorder %s25, 0
      %p157 = por %p155, %p156
      %s158 = ssub.s32 %s19, %s26
      %p159 = scmp.eq.s32.totalorder %s158, 0
      %s161 = sadd.s32 %s160, 1
      %s162 = scalar_select %p159, %s160, %s161
      %p165 = pneg %p159
      %p166 = scmp.eq.s32.totalorder %s19, 1
      %p167 = por %p165, %p166
      %p168 = scmp.ne.s32.totalorder %s160, %s163
      %p169 = scmp.eq.s32.totalorder %s19, 0
      %p170 = por %p168, %p169
      %p171 = scmp.ne.s32.totalorder %s160, %s163
      %p172 = scmp.eq.s32.totalorder %s24, 1
      %p173 = por %p171, %p172
      %p174 = scmp.ne.s32.totalorder %s163, %s164
      %p175 = scmp.eq.s32.totalorder %s24, 0
      %p176 = por %p174, %p175
      %p177 = scmp.ne.s32.totalorder %s163, %s164
      %p178 = scmp.eq.s32.totalorder %s25, 1
      %p179 = por %p177, %p178
      %p181 = scmp.ne.s32.totalorder %s164, %s180
      %p182 = scmp.eq.s32.totalorder %s25, 0
      %p183 = por %p181, %p182
      %s184 = ssub.s32 %s19, %s26
      %p185 = scmp.eq.s32.totalorder %s184, 0
      %s187 = sadd.s32 %s186, 1
      %s188 = scalar_select %p185, %s186, %s187
      %p191 = pneg %p185
      %p192 = scmp.eq.s32.totalorder %s19, 1
      %p193 = por %p191, %p192
      %p194 = scmp.ne.s32.totalorder %s186, %s189
      %p195 = scmp.eq.s32.totalorder %s19, 0
      %p196 = por %p194, %p195
      %p197 = scmp.ne.s32.totalorder %s186, %s189
      %p198 = scmp.eq.s32.totalorder %s24, 1
      %p199 = por %p197, %p198
      %p200 = scmp.ne.s32.totalorder %s189, %s190
      %p201 = scmp.eq.s32.totalorder %s24, 0
      %p202 = por %p200, %p201
      %p203 = scmp.ne.s32.totalorder %s189, %s190
      %p204 = scmp.eq.s32.totalorder %s25, 1
      %p205 = por %p203, %p204
      %p207 = scmp.ne.s32.totalorder %s190, %s206
      %p208 = scmp.eq.s32.totalorder %s25, 0
      %p209 = por %p207, %p208
      %p210 = scmp.le.s32.totalorder 1, %s19
      %p211 = scmp.lt.s32.totalorder %s19, 3
      %p212 = pnand %p210, %p211
      %p213 = pneg %p212
      // Predicated region
      $region9: #{tpu_custom_call.1} parent=5 // pred_check
        _
      $region10: #{tpu_custom_call.1} parent=5 // pred_check_branch
        %215 = sbr.rel (%p212) target = $region12
      $region11: #{tpu_custom_call.1} parent=5 // pred_region
        %s216 = ssub.s32 %s19, 1
        // Predicated region
        $region13: #{tpu_custom_call.1} parent=11 // pred_check
          %p217 = pneg %p40
        $region14: #{tpu_custom_call.1} parent=11 // pred_check_branch
          %219 = sbr.rel (%p217) target = $region16
        $region15: #{tpu_custom_call.1} parent=11 // pred_region
          %s221 = ssub.s32 32, 32
          %222 = vsyncadd [#allocation3], %s221
          %s224 = sshll.u32 [#allocation2], 4
          %s225 = int_to_ptr.vmem [resolvable:$true] %s224
          %227 = dma.hbm_to_vmem [thread:$0]  %s0, 32, %s225, [#allocation3]
        $region16: #{tpu_custom_call.1} parent=11 // pred_fallthru
          _
        // Predicated region
        $region17: #{tpu_custom_call.1} parent=11 // pred_check
          %p228 = pneg %p61
        $region18: #{tpu_custom_call.1} parent=11 // pred_check_branch
          %230 = sbr.rel (%p228) target = $region20
        $region19: #{tpu_custom_call.1} parent=11 // pred_region
          %s232 = ssub.s32 512, 512
          %233 = vsyncadd [#allocation6], %s232
          %s235 = sshll.u32 [#allocation5], 4
          %s236 = int_to_ptr.vmem [resolvable:$true] %s235
          %238 = dma.hbm_to_vmem [thread:$0]  %s1, 512, %s236, [#allocation6]
        $region20: #{tpu_custom_call.1} parent=11 // pred_fallthru
          _
        // Predicated region
        $region21: #{tpu_custom_call.1} parent=11 // pred_check
          %p239 = pneg %p82
        $region22: #{tpu_custom_call.1} parent=11 // pred_check_branch
          %241 = sbr.rel (%p239) target = $region24
        $region23: #{tpu_custom_call.1} parent=11 // pred_region
          %s243 = ssub.s32 128, 128
          %244 = vsyncadd [#allocation6], %s243
          %s246 = sshll.u32 [#allocation7], 4
          %s247 = int_to_ptr.vmem [resolvable:$true] %s246
          %249 = dma.hbm_to_vmem [thread:$0]  %s2, 128, %s247, [#allocation6]
        $region24: #{tpu_custom_call.1} parent=11 // pred_fallthru
          _
        // Predicated region
        $region25: #{tpu_custom_call.1} parent=11 // pred_check
          %p250 = pneg %p103
        $region26: #{tpu_custom_call.1} parent=11 // pred_check_branch
          %252 = sbr.rel (%p250) target = $region28
        $region27: #{tpu_custom_call.1} parent=11 // pred_region
          _
        $region28: #{tpu_custom_call.1} parent=11 // pred_fallthru
          _
        // Predicated region
        $region29: #{tpu_custom_call.1} parent=11 // pred_check
          %p253 = pneg %p124
        $region30: #{tpu_custom_call.1} parent=11 // pred_check_branch
          %255 = sbr.rel (%p253) target = $region32
        $region31: #{tpu_custom_call.1} parent=11 // pred_region
          %s257 = ssub.s32 128, 128
          %258 = vsyncadd [#allocation9], %s257
          %s260 = sshll.u32 [#allocation8], 4
          %s261 = int_to_ptr.vmem [resolvable:$true] %s260
          %263 = dma.hbm_to_vmem [thread:$0]  %s4, 128, %s261, [#allocation9]
        $region32: #{tpu_custom_call.1} parent=11 // pred_fallthru
          _
      $region12: #{tpu_custom_call.1} parent=5 // pred_fallthru
        _
      %p264 = scmp.lt.s32.totalorder %s19, 2
      // Predicated region
      $region33: #{tpu_custom_call.1} parent=5 // pred_check
        %p265 = pneg %p264
      $region34: #{tpu_custom_call.1} parent=5 // pred_check_branch
        %267 = sbr.rel (%p265) target = $region36
      $region35: #{tpu_custom_call.1} parent=5 // pred_region
        // Predicated region
        $region37: #{tpu_custom_call.1} parent=35 // pred_check
          %p268 = pneg %p144
        $region38: #{tpu_custom_call.1} parent=35 // pred_check_branch
          %270 = sbr.rel (%p268) target = $region40
        $region39: #{tpu_custom_call.1} parent=35 // pred_region
          %s271 = sand.u32 %s19, 1
          %s272 = scalar_lea.sflag [#allocation3], %s271
          %s273 = sand.u32 %s134, 1
          %s274 = smul.addr %s273, 1024
          %s275 = scalar_lea.vmem [#allocation10], %s274
          %s276 = smul.u32 2, %s19
          %s278 = ssub.s32 16384, 16384
          %279 = vsyncadd %s272, %s278
          %s280 = smul.addr %s276, 64
          %s281 = scalar_lea.hbm %s5, %s280
          %s282 = sshll.u32 %s275, 4
          %s283 = int_to_ptr.vmem [resolvable:$true] %s282
          %288 = dma.hbm_to_vmem [thread:$0]  %s281, 16384, %s283, %s272, 256, 128, 8
        $region40: #{tpu_custom_call.1} parent=35 // pred_fallthru
          _
        // Predicated region
        $region41: #{tpu_custom_call.1} parent=35 // pred_check
          %p289 = pneg %p170
        $region42: #{tpu_custom_call.1} parent=35 // pred_check_branch
          %291 = sbr.rel (%p289) target = $region44
        $region43: #{tpu_custom_call.1} parent=35 // pred_region
          %s292 = smul.u32 2, %s19
          %p293 = scmp.lt.s32.totalorder %s292, 3
          %s294 = scalar_select %p293, %s292, 3
          %s295 = scalar_lea.vmem %s6, %s294
          %s296 = smul.u32 2, %s19
        $region44: #{tpu_custom_call.1} parent=35 // pred_fallthru
          _
      $region36: #{tpu_custom_call.1} parent=5 // pred_fallthru
        _
      %p297 = scmp.le.s32.totalorder 1, %s19
      %p298 = scmp.lt.s32.totalorder %s19, 3
      %p299 = pnand %p297, %p298
      %p300 = pneg %p299
      // Predicated region
      $region45: #{tpu_custom_call.1} parent=5 // pred_check
        _
      $region46: #{tpu_custom_call.1} parent=5 // pred_check_branch
        %302 = sbr.rel (%p299) target = $region48
      $region47: #{tpu_custom_call.1} parent=5 // pred_region
        %s303 = ssub.s32 %s19, 1
        // Predicated region
        $region49: #{tpu_custom_call.1} parent=47 // pred_check
          %p304 = pneg %p40
        $region50: #{tpu_custom_call.1} parent=47 // pred_check_branch
          %306 = sbr.rel (%p304) target = $region52
        $region51: #{tpu_custom_call.1} parent=47 // pred_region
          %307 = dma.done [#allocation3], 32
        $region52: #{tpu_custom_call.1} parent=47 // pred_fallthru
          _
        // Predicated region
        $region53: #{tpu_custom_call.1} parent=47 // pred_check
          %p308 = pneg %p61
        $region54: #{tpu_custom_call.1} parent=47 // pred_check_branch
          %310 = sbr.rel (%p308) target = $region56
        $region55: #{tpu_custom_call.1} parent=47 // pred_region
          %311 = dma.done [#allocation6], 512
        $region56: #{tpu_custom_call.1} parent=47 // pred_fallthru
          _
        // Predicated region
        $region57: #{tpu_custom_call.1} parent=47 // pred_check
          %p312 = pneg %p82
        $region58: #{tpu_custom_call.1} parent=47 // pred_check_branch
          %314 = sbr.rel (%p312) target = $region60
        $region59: #{tpu_custom_call.1} parent=47 // pred_region
          %315 = dma.done [#allocation6], 128
        $region60: #{tpu_custom_call.1} parent=47 // pred_fallthru
          _
        // Predicated region
        $region61: #{tpu_custom_call.1} parent=47 // pred_check
          %p316 = pneg %p124
        $region62: #{tpu_custom_call.1} parent=47 // pred_check_branch
          %318 = sbr.rel (%p316) target = $region64
        $region63: #{tpu_custom_call.1} parent=47 // pred_region
          %319 = dma.done [#allocation9], 128
        $region64: #{tpu_custom_call.1} parent=47 // pred_fallthru
          _
        %s320 = sand.u32 %s24, 1
        %s321 = scalar_lea.sflag [#allocation3], %s320
        %s322 = sand.u32 %s137, 1
        %s323 = smul.addr %s322, 1024
        %s324 = scalar_lea.vmem [#allocation10], %s323
        // Predicated region
        $region65: #{tpu_custom_call.1} parent=47 // pred_check
          %p325 = pneg %p150
        $region66: #{tpu_custom_call.1} parent=47 // pred_check_branch
          %327 = sbr.rel (%p325) target = $region68
        $region67: #{tpu_custom_call.1} parent=47 // pred_region
          %328 = dma.done %s321, 16384
        $region68: #{tpu_custom_call.1} parent=47 // pred_fallthru
          _
        %p329 = pneg %p40
        %p330 = pneg %p37
        %p331 = pneg %p61
        %p332 = pneg %p58
        %p333 = pneg %p82
        %p334 = pneg %p79
        %p335 = pneg %p103
        %p336 = pneg %p100
        %p337 = pneg %p124
        %p338 = pneg %p121
        %s339 = sand.u32 %s24, 1
        %s340 = scalar_lea.sflag [#allocation3], %s339
        %s341 = sand.u32 %s137, 1
        %s342 = smul.addr %s341, 1024
        %s343 = scalar_lea.vmem [#allocation10], %s342
        %p344 = pneg %p150
        %p345 = pneg %p147
        %s346 = smul.u32 2, %s24
        %p347 = scmp.lt.s32.totalorder %s346, 3
        %s348 = scalar_select %p347, %s346, 3
        %s349 = scalar_lea.vmem %s6, %s348
        %p350 = pneg %p176
        %p351 = pneg %p173
        %p352 = pneg %p202
        %p353 = pneg %p199
        %s354 = sand.u32 %s189, 1
        %s355 = scalar_lea.sflag [#allocation4], %s354
        %s356 = sand.u32 %s189, 1
        %s357 = smul.addr %s356, 4
        %s358 = scalar_lea.vmem [#allocation11], %s357
        %s359 = smul.u32 2, %s24
        %s360 = smul.u32 2, %s24
        %p361 = scmp.lt.s32.totalorder %s360, 3
        %s362 = scalar_select %p361, %s360, 3
        %s363 = scalar_lea.vmem %s6, %s362
        %s364 = smul.u32 2, %s24
        %s365 = smul.u32 2, %s24
        %v366 = vld [vmem:[#allocation2] sm:$0x3]
        %v367 = vld [vmem:[#allocation5] sm:$0xff]
        %v368 = vld [vmem:[#allocation5 + $0x8] sm:$0xff]
        %v369 = vld [vmem:[#allocation5 + $0x10] sm:$0xff]
        %v370 = vld [vmem:[#allocation5 + $0x18] sm:$0xff]
        %372 = vset.pattern.permute.xlu0 0
        %373 = vperm.xlu0 %372, %v366
        %v374 = vpop.permute.xlu0 %373
        %v380 = vlaneseq
        %v381 = vshrl.u32 %v380, 7
        %v382 = vsub.s32 0, %v381
        %v383 = vrot.slane %v367, %v382
        %v384 = vlaneseq
        %v385 = vshrl.u32 %v384, 7
        %v386 = vsub.s32 4, %v385
        %v387 = vrot.slane %v367, %v386
        %v388 = vlaneseq
        %v389 = vshrl.u32 %v388, 7
        %v390 = vsub.s32 0, %v389
        %v391 = vrot.slane %v368, %v390
        %v392 = vlaneseq
        %v393 = vshrl.u32 %v392, 7
        %v394 = vsub.s32 4, %v393
        %v395 = vrot.slane %v368, %v394
        %v396 = vlaneseq
        %v397 = vshrl.u32 %v396, 7
        %v398 = vsub.s32 0, %v397
        %v399 = vrot.slane %v369, %v398
        %v400 = vlaneseq
        %v401 = vshrl.u32 %v400, 7
        %v402 = vsub.s32 4, %v401
        %v403 = vrot.slane %v369, %v402
        %v404 = vlaneseq
        %v405 = vshrl.u32 %v404, 7
        %v406 = vsub.s32 0, %v405
        %v407 = vrot.slane %v370, %v406
        %v408 = vlaneseq
        %v409 = vshrl.u32 %v408, 7
        %v410 = vsub.s32 4, %v409
        %v411 = vrot.slane %v370, %v410
        %v420 = vlaneseq
        %v421 = vshrl.u32 %v420, 7
        %v422 = vsub.s32 0, %v421
        %v423 = vrot.slane %v383, %v422
        %v424 = vlaneseq
        %v425 = vshrl.u32 %v424, 7
        %v426 = vsub.s32 0, %v425
        %v427 = vrot.slane %v387, %v426
        %v428 = vlaneseq
        %v429 = vshrl.u32 %v428, 7
        %v430 = vsub.s32 0, %v429
        %v431 = vrot.slane %v391, %v430
        %v432 = vlaneseq
        %v433 = vshrl.u32 %v432, 7
        %v434 = vsub.s32 0, %v433
        %v435 = vrot.slane %v395, %v434
        %v436 = vlaneseq
        %v437 = vshrl.u32 %v436, 7
        %v438 = vsub.s32 0, %v437
        %v439 = vrot.slane %v399, %v438
        %v440 = vlaneseq
        %v441 = vshrl.u32 %v440, 7
        %v442 = vsub.s32 0, %v441
        %v443 = vrot.slane %v403, %v442
        %v444 = vlaneseq
        %v445 = vshrl.u32 %v444, 7
        %v446 = vsub.s32 0, %v445
        %v447 = vrot.slane %v407, %v446
        %v448 = vlaneseq
        %v449 = vshrl.u32 %v448, 7
        %v450 = vsub.s32 0, %v449
        %v451 = vrot.slane %v411, %v450
        %v452 = vmul.f32 %v374, %v423
        %v453 = vmul.f32 %v374, %v427
        %v454 = vmul.f32 %v374, %v431
        %v455 = vmul.f32 %v374, %v435
        %v456 = vmul.f32 %v374, %v439
        %v457 = vmul.f32 %v374, %v443
        %v458 = vmul.f32 %v374, %v447
        %v459 = vmul.f32 %v374, %v451
        %460 = vset.pattern.permute.xlu0 1
        %461 = vperm.xlu0 %460, %v366
        %v462 = vpop.permute.xlu0 %461
        %v464 = vlaneseq
        %v465 = vshrl.u32 %v464, 7
        %v466 = vsub.s32 1, %v465
        %v467 = vrot.slane %v367, %v466
        %v468 = vlaneseq
        %v469 = vshrl.u32 %v468, 7
        %v470 = vsub.s32 5, %v469
        %v471 = vrot.slane %v367, %v470
        %v472 = vlaneseq
        %v473 = vshrl.u32 %v472, 7
        %v474 = vsub.s32 1, %v473
        %v475 = vrot.slane %v368, %v474
        %v476 = vlaneseq
        %v477 = vshrl.u32 %v476, 7
        %v478 = vsub.s32 5, %v477
        %v479 = vrot.slane %v368, %v478
        %v480 = vlaneseq
        %v481 = vshrl.u32 %v480, 7
        %v482 = vsub.s32 1, %v481
        %v483 = vrot.slane %v369, %v482
        %v484 = vlaneseq
        %v485 = vshrl.u32 %v484, 7
        %v486 = vsub.s32 5, %v485
        %v487 = vrot.slane %v369, %v486
        %v488 = vlaneseq
        %v489 = vshrl.u32 %v488, 7
        %v490 = vsub.s32 1, %v489
        %v491 = vrot.slane %v370, %v490
        %v492 = vlaneseq
        %v493 = vshrl.u32 %v492, 7
        %v494 = vsub.s32 5, %v493
        %v495 = vrot.slane %v370, %v494
        %v504 = vlaneseq
        %v505 = vshrl.u32 %v504, 7
        %v506 = vsub.s32 1, %v505
        %v507 = vrot.slane %v467, %v506
        %v508 = vlaneseq
        %v509 = vshrl.u32 %v508, 7
        %v510 = vsub.s32 1, %v509
        %v511 = vrot.slane %v471, %v510
        %v512 = vlaneseq
        %v513 = vshrl.u32 %v512, 7
        %v514 = vsub.s32 1, %v513
        %v515 = vrot.slane %v475, %v514
        %v516 = vlaneseq
        %v517 = vshrl.u32 %v516, 7
        %v518 = vsub.s32 1, %v517
        %v519 = vrot.slane %v479, %v518
        %v520 = vlaneseq
        %v521 = vshrl.u32 %v520, 7
        %v522 = vsub.s32 1, %v521
        %v523 = vrot.slane %v483, %v522
        %v524 = vlaneseq
        %v525 = vshrl.u32 %v524, 7
        %v526 = vsub.s32 1, %v525
        %v527 = vrot.slane %v487, %v526
        %v528 = vlaneseq
        %v529 = vshrl.u32 %v528, 7
        %v530 = vsub.s32 1, %v529
        %v531 = vrot.slane %v491, %v530
        %v532 = vlaneseq
        %v533 = vshrl.u32 %v532, 7
        %v534 = vsub.s32 1, %v533
        %v535 = vrot.slane %v495, %v534
        %v536 = vmul.f32 %v462, %v507
        %v537 = vmul.f32 %v462, %v511
        %v538 = vmul.f32 %v462, %v515
        %v539 = vmul.f32 %v462, %v519
        %v540 = vmul.f32 %v462, %v523
        %v541 = vmul.f32 %v462, %v527
        %v542 = vmul.f32 %v462, %v531
        %v543 = vmul.f32 %v462, %v535
        %v544 = vadd.f32 %v452, %v536
        %v545 = vadd.f32 %v453, %v537
        %v546 = vadd.f32 %v454, %v538
        %v547 = vadd.f32 %v455, %v539
        %v548 = vadd.f32 %v456, %v540
        %v549 = vadd.f32 %v457, %v541
        %v550 = vadd.f32 %v458, %v542
        %v551 = vadd.f32 %v459, %v543
        %552 = vset.pattern.permute.xlu0 2
        %553 = vperm.xlu0 %552, %v366
        %v554 = vpop.permute.xlu0 %553
        %v556 = vlaneseq
        %v557 = vshrl.u32 %v556, 7
        %v558 = vsub.s32 2, %v557
        %v559 = vrot.slane %v367, %v558
        %v560 = vlaneseq
        %v561 = vshrl.u32 %v560, 7
        %v562 = vsub.s32 6, %v561
        %v563 = vrot.slane %v367, %v562
        %v564 = vlaneseq
        %v565 = vshrl.u32 %v564, 7
        %v566 = vsub.s32 2, %v565
        %v567 = vrot.slane %v368, %v566
        %v568 = vlaneseq
        %v569 = vshrl.u32 %v568, 7
        %v570 = vsub.s32 6, %v569
        %v571 = vrot.slane %v368, %v570
        %v572 = vlaneseq
        %v573 = vshrl.u32 %v572, 7
        %v574 = vsub.s32 2, %v573
        %v575 = vrot.slane %v369, %v574
        %v576 = vlaneseq
        %v577 = vshrl.u32 %v576, 7
        %v578 = vsub.s32 6, %v577
        %v579 = vrot.slane %v369, %v578
        %v580 = vlaneseq
        %v581 = vshrl.u32 %v580, 7
        %v582 = vsub.s32 2, %v581
        %v583 = vrot.slane %v370, %v582
        %v584 = vlaneseq
        %v585 = vshrl.u32 %v584, 7
        %v586 = vsub.s32 6, %v585
        %v587 = vrot.slane %v370, %v586
        %v596 = vlaneseq
        %v597 = vshrl.u32 %v596, 7
        %v598 = vsub.s32 2, %v597
        %v599 = vrot.slane %v559, %v598
        %v600 = vlaneseq
        %v601 = vshrl.u32 %v600, 7
        %v602 = vsub.s32 2, %v601
        %v603 = vrot.slane %v563, %v602
        %v604 = vlaneseq
        %v605 = vshrl.u32 %v604, 7
        %v606 = vsub.s32 2, %v605
        %v607 = vrot.slane %v567, %v606
        %v608 = vlaneseq
        %v609 = vshrl.u32 %v608, 7
        %v610 = vsub.s32 2, %v609
        %v611 = vrot.slane %v571, %v610
        %v612 = vlaneseq
        %v613 = vshrl.u32 %v612, 7
        %v614 = vsub.s32 2, %v613
        %v615 = vrot.slane %v575, %v614
        %v616 = vlaneseq
        %v617 = vshrl.u32 %v616, 7
        %v618 = vsub.s32 2, %v617
        %v619 = vrot.slane %v579, %v618
        %v620 = vlaneseq
        %v621 = vshrl.u32 %v620, 7
        %v622 = vsub.s32 2, %v621
        %v623 = vrot.slane %v583, %v622
        %v624 = vlaneseq
        %v625 = vshrl.u32 %v624, 7
        %v626 = vsub.s32 2, %v625
        %v627 = vrot.slane %v587, %v626
        %v628 = vmul.f32 %v554, %v599
        %v629 = vmul.f32 %v554, %v603
        %v630 = vmul.f32 %v554, %v607
        %v631 = vmul.f32 %v554, %v611
        %v632 = vmul.f32 %v554, %v615
        %v633 = vmul.f32 %v554, %v619
        %v634 = vmul.f32 %v554, %v623
        %v635 = vmul.f32 %v554, %v627
        %v636 = vadd.f32 %v544, %v628
        %v637 = vadd.f32 %v545, %v629
        %v638 = vadd.f32 %v546, %v630
        %v639 = vadd.f32 %v547, %v631
        %v640 = vadd.f32 %v548, %v632
        %v641 = vadd.f32 %v549, %v633
        %v642 = vadd.f32 %v550, %v634
        %v643 = vadd.f32 %v551, %v635
        %644 = vset.pattern.permute.xlu0 3
        %645 = vperm.xlu0 %644, %v366
        %v646 = vpop.permute.xlu0 %645
        %v648 = vlaneseq
        %v649 = vshrl.u32 %v648, 7
        %v650 = vsub.s32 3, %v649
        %v651 = vrot.slane %v367, %v650
        %v652 = vlaneseq
        %v653 = vshrl.u32 %v652, 7
        %v654 = vsub.s32 7, %v653
        %v655 = vrot.slane %v367, %v654
        %v656 = vlaneseq
        %v657 = vshrl.u32 %v656, 7
        %v658 = vsub.s32 3, %v657
        %v659 = vrot.slane %v368, %v658
        %v660 = vlaneseq
        %v661 = vshrl.u32 %v660, 7
        %v662 = vsub.s32 7, %v661
        %v663 = vrot.slane %v368, %v662
        %v664 = vlaneseq
        %v665 = vshrl.u32 %v664, 7
        %v666 = vsub.s32 3, %v665
        %v667 = vrot.slane %v369, %v666
        %v668 = vlaneseq
        %v669 = vshrl.u32 %v668, 7
        %v670 = vsub.s32 7, %v669
        %v671 = vrot.slane %v369, %v670
        %v672 = vlaneseq
        %v673 = vshrl.u32 %v672, 7
        %v674 = vsub.s32 3, %v673
        %v675 = vrot.slane %v370, %v674
        %v676 = vlaneseq
        %v677 = vshrl.u32 %v676, 7
        %v678 = vsub.s32 7, %v677
        %v679 = vrot.slane %v370, %v678
        %v688 = vlaneseq
        %v689 = vshrl.u32 %v688, 7
        %v690 = vsub.s32 3, %v689
        %v691 = vrot.slane %v651, %v690
        %v692 = vlaneseq
        %v693 = vshrl.u32 %v692, 7
        %v694 = vsub.s32 3, %v693
        %v695 = vrot.slane %v655, %v694
        %v696 = vlaneseq
        %v697 = vshrl.u32 %v696, 7
        %v698 = vsub.s32 3, %v697
        %v699 = vrot.slane %v659, %v698
        %v700 = vlaneseq
        %v701 = vshrl.u32 %v700, 7
        %v702 = vsub.s32 3, %v701
        %v703 = vrot.slane %v663, %v702
        %v704 = vlaneseq
        %v705 = vshrl.u32 %v704, 7
        %v706 = vsub.s32 3, %v705
        %v707 = vrot.slane %v667, %v706
        %v708 = vlaneseq
        %v709 = vshrl.u32 %v708, 7
        %v710 = vsub.s32 3, %v709
        %v711 = vrot.slane %v671, %v710
        %v712 = vlaneseq
        %v713 = vshrl.u32 %v712, 7
        %v714 = vsub.s32 3, %v713
        %v715 = vrot.slane %v675, %v714
        %v716 = vlaneseq
        %v717 = vshrl.u32 %v716, 7
        %v718 = vsub.s32 3, %v717
        %v719 = vrot.slane %v679, %v718
        %v720 = vmul.f32 %v646, %v691
        %v721 = vmul.f32 %v646, %v695
        %v722 = vmul.f32 %v646, %v699
        %v723 = vmul.f32 %v646, %v703
        %v724 = vmul.f32 %v646, %v707
        %v725 = vmul.f32 %v646, %v711
        %v726 = vmul.f32 %v646, %v715
        %v727 = vmul.f32 %v646, %v719
        %v728 = vadd.f32 %v636, %v720
        %v729 = vadd.f32 %v637, %v721
        %v730 = vadd.f32 %v638, %v722
        %v731 = vadd.f32 %v639, %v723
        %v732 = vadd.f32 %v640, %v724
        %v733 = vadd.f32 %v641, %v725
        %v734 = vadd.f32 %v642, %v726
        %v735 = vadd.f32 %v643, %v727
        %v736 = vld [vmem:[#allocation7] sm:$0xff]
        %v738 = vlaneseq
        %v739 = vshrl.u32 %v738, 7
        %v740 = vsub.s32 0, %v739
        %v741 = vrot.slane %v736, %v740
        %v742 = vlaneseq
        %v743 = vshrl.u32 %v742, 7
        %v744 = vsub.s32 1, %v743
        %v745 = vrot.slane %v736, %v744
        %v746 = vlaneseq
        %v747 = vshrl.u32 %v746, 7
        %v748 = vsub.s32 2, %v747
        %v749 = vrot.slane %v736, %v748
        %v750 = vlaneseq
        %v751 = vshrl.u32 %v750, 7
        %v752 = vsub.s32 3, %v751
        %v753 = vrot.slane %v736, %v752
        %v754 = vlaneseq
        %v755 = vshrl.u32 %v754, 7
        %v756 = vsub.s32 4, %v755
        %v757 = vrot.slane %v736, %v756
        %v758 = vlaneseq
        %v759 = vshrl.u32 %v758, 7
        %v760 = vsub.s32 5, %v759
        %v761 = vrot.slane %v736, %v760
        %v762 = vlaneseq
        %v763 = vshrl.u32 %v762, 7
        %v764 = vsub.s32 6, %v763
        %v765 = vrot.slane %v736, %v764
        %v766 = vlaneseq
        %v767 = vshrl.u32 %v766, 7
        %v768 = vsub.s32 7, %v767
        %v769 = vrot.slane %v736, %v768
        %v778 = vadd.f32 %v728, %v741
        %v779 = vadd.f32 %v729, %v745
        %v780 = vadd.f32 %v730, %v749
        %v781 = vadd.f32 %v731, %v753
        %v782 = vadd.f32 %v732, %v757
        %v783 = vadd.f32 %v733, %v761
        %v784 = vadd.f32 %v734, %v765
        %v785 = vadd.f32 %v735, %v769
        %vm786 = vcmask 1041408
        %v787 = vsel %vm786, %v778, 0.0
        %v788 = vrot.slane %v787, 4
        %v789 = vadd.f32 %v787, %v788
        %v790 = vrot.slane %v789, 2
        %v791 = vadd.f32 %v789, %v790
        %v792 = vrot.slane %v791, 1
        %v793 = vadd.f32 %v791, %v792
        %v794 = vsel %vm786, %v779, 0.0
        %v795 = vrot.slane %v794, 4
        %v796 = vadd.f32 %v794, %v795
        %v797 = vrot.slane %v796, 2
        %v798 = vadd.f32 %v796, %v797
        %v799 = vrot.slane %v798, 1
        %v800 = vadd.f32 %v798, %v799
        %v801 = vsel %vm786, %v780, 0.0
        %v802 = vrot.slane %v801, 4
        %v803 = vadd.f32 %v801, %v802
        %v804 = vrot.slane %v803, 2
        %v805 = vadd.f32 %v803, %v804
        %v806 = vrot.slane %v805, 1
        %v807 = vadd.f32 %v805, %v806
        %v808 = vsel %vm786, %v781, 0.0
        %v809 = vrot.slane %v808, 4
        %v810 = vadd.f32 %v808, %v809
        %v811 = vrot.slane %v810, 2
        %v812 = vadd.f32 %v810, %v811
        %v813 = vrot.slane %v812, 1
        %v814 = vadd.f32 %v812, %v813
        %v815 = vsel %vm786, %v782, 0.0
        %v816 = vrot.slane %v815, 4
        %v817 = vadd.f32 %v815, %v816
        %v818 = vrot.slane %v817, 2
        %v819 = vadd.f32 %v817, %v818
        %v820 = vrot.slane %v819, 1
        %v821 = vadd.f32 %v819, %v820
        %v822 = vsel %vm786, %v783, 0.0
        %v823 = vrot.slane %v822, 4
        %v824 = vadd.f32 %v822, %v823
        %v825 = vrot.slane %v824, 2
        %v826 = vadd.f32 %v824, %v825
        %v827 = vrot.slane %v826, 1
        %v828 = vadd.f32 %v826, %v827
        %v829 = vsel %vm786, %v784, 0.0
        %v830 = vrot.slane %v829, 4
        %v831 = vadd.f32 %v829, %v830
        %v832 = vrot.slane %v831, 2
        %v833 = vadd.f32 %v831, %v832
        %v834 = vrot.slane %v833, 1
        %v835 = vadd.f32 %v833, %v834
        %v836 = vsel %vm786, %v785, 0.0
        %v837 = vrot.slane %v836, 4
        %v838 = vadd.f32 %v836, %v837
        %v839 = vrot.slane %v838, 2
        %v840 = vadd.f32 %v838, %v839
        %v841 = vrot.slane %v840, 1
        %v842 = vadd.f32 %v840, %v841
        %v843 = vmul.f32 %v793, 0.5
        %v844 = vmul.f32 %v800, 0.5
        %v845 = vmul.f32 %v807, 0.5
        %v846 = vmul.f32 %v814, 0.5
        %v847 = vmul.f32 %v821, 0.5
        %v848 = vmul.f32 %v828, 0.5
        %v849 = vmul.f32 %v835, 0.5
        %v850 = vmul.f32 %v842, 0.5
        %v851 = vsub.f32 %v778, %v843
        %v852 = vsub.f32 %v779, %v844
        %v853 = vsub.f32 %v780, %v845
        %v854 = vsub.f32 %v781, %v846
        %v855 = vsub.f32 %v782, %v847
        %v856 = vsub.f32 %v783, %v848
        %v857 = vsub.f32 %v784, %v849
        %v858 = vsub.f32 %v785, %v850
        %v859 = vmul.f32 %v851, %v851
        %v860 = vmul.f32 %v852, %v852
        %v861 = vmul.f32 %v853, %v853
        %v862 = vmul.f32 %v854, %v854
        %v863 = vmul.f32 %v855, %v855
        %v864 = vmul.f32 %v856, %v856
        %v865 = vmul.f32 %v857, %v857
        %v866 = vmul.f32 %v858, %v858
        %v867 = vsel %vm786, %v859, 0.0
        %v868 = vrot.slane %v867, 4
        %v869 = vadd.f32 %v867, %v868
        %v870 = vrot.slane %v869, 2
        %v871 = vadd.f32 %v869, %v870
        %v872 = vrot.slane %v871, 1
        %v873 = vadd.f32 %v871, %v872
        %v874 = vsel %vm786, %v860, 0.0
        %v875 = vrot.slane %v874, 4
        %v876 = vadd.f32 %v874, %v875
        %v877 = vrot.slane %v876, 2
        %v878 = vadd.f32 %v876, %v877
        %v879 = vrot.slane %v878, 1
        %v880 = vadd.f32 %v878, %v879
        %v881 = vsel %vm786, %v861, 0.0
        %v882 = vrot.slane %v881, 4
        %v883 = vadd.f32 %v881, %v882
        %v884 = vrot.slane %v883, 2
        %v885 = vadd.f32 %v883, %v884
        %v886 = vrot.slane %v885, 1
        %v887 = vadd.f32 %v885, %v886
        %v888 = vsel %vm786, %v862, 0.0
        %v889 = vrot.slane %v888, 4
        %v890 = vadd.f32 %v888, %v889
        %v891 = vrot.slane %v890, 2
        %v892 = vadd.f32 %v890, %v891
        %v893 = vrot.slane %v892, 1
        %v894 = vadd.f32 %v892, %v893
        %v895 = vsel %vm786, %v863, 0.0
        %v896 = vrot.slane %v895, 4
        %v897 = vadd.f32 %v895, %v896
        %v898 = vrot.slane %v897, 2
        %v899 = vadd.f32 %v897, %v898
        %v900 = vrot.slane %v899, 1
        %v901 = vadd.f32 %v899, %v900
        %v902 = vsel %vm786, %v864, 0.0
        %v903 = vrot.slane %v902, 4
        %v904 = vadd.f32 %v902, %v903
        %v905 = vrot.slane %v904, 2
        %v906 = vadd.f32 %v904, %v905
        %v907 = vrot.slane %v906, 1
        %v908 = vadd.f32 %v906, %v907
        %v909 = vsel %vm786, %v865, 0.0
        %v910 = vrot.slane %v909, 4
        %v911 = vadd.f32 %v909, %v910
        %v912 = vrot.slane %v911, 2
        %v913 = vadd.f32 %v911, %v912
        %v914 = vrot.slane %v913, 1
        %v915 = vadd.f32 %v913, %v914
        %v916 = vsel %vm786, %v866, 0.0
        %v917 = vrot.slane %v916, 4
        %v918 = vadd.f32 %v916, %v917
        %v919 = vrot.slane %v918, 2
        %v920 = vadd.f32 %v918, %v919
        %v921 = vrot.slane %v920, 1
        %v922 = vadd.f32 %v920, %v921
        %v923 = vmul.f32 %v873, 0.5
        %v924 = vmul.f32 %v880, 0.5
        %v925 = vmul.f32 %v887, 0.5
        %v926 = vmul.f32 %v894, 0.5
        %v927 = vmul.f32 %v901, 0.5
        %v928 = vmul.f32 %v908, 0.5
        %v929 = vmul.f32 %v915, 0.5
        %v930 = vmul.f32 %v922, 0.5
        %v931 = vld [vmem:[%s3] sm:$0xff]
        %v932 = vadd.f32 %v923, 1e-05
        %v933 = vadd.f32 %v924, 1e-05
        %v934 = vadd.f32 %v925, 1e-05
        %v935 = vadd.f32 %v926, 1e-05
        %v936 = vadd.f32 %v927, 1e-05
        %v937 = vadd.f32 %v928, 1e-05
        %v938 = vadd.f32 %v929, 1e-05
        %v939 = vadd.f32 %v930, 1e-05
        %v940 = vrsqrt.pop %v932
        %v941 = vrsqrt.pop %v933
        %v942 = vrsqrt.pop %v934
        %v943 = vrsqrt.pop %v935
        %v944 = vrsqrt.pop %v936
        %v945 = vrsqrt.pop %v937
        %v946 = vrsqrt.pop %v938
        %v947 = vrsqrt.pop %v939
        %v956 = vcombine.low %v940, %v941
        %v957 = vcombine.low %v942, %v943
        %v958 = vcombine.low %v944, %v945
        %v959 = vcombine.low %v946, %v947
        %v961 = vunpack.c.l.s4 1966171168
        %v962 = vunpack.c.0.s8 %v961
        %v963 = vlaneseq
        %v964 = vshrl.u32 %v963, 7
        %v965 = vsub.s32 %v962, %v964
        %v966 = vrot.slane %v956, %v965
        %v968 = vunpack.c.l.s4 1966171168
        %v969 = vunpack.c.0.s8 %v968
        %v970 = vlaneseq
        %v971 = vshrl.u32 %v970, 7
        %v972 = vsub.s32 %v969, %v971
        %v973 = vrot.slane %v957, %v972
        %v975 = vunpack.c.l.s4 1966171168
        %v976 = vunpack.c.0.s8 %v975
        %v977 = vlaneseq
        %v978 = vshrl.u32 %v977, 7
        %v979 = vsub.s32 %v976, %v978
        %v980 = vrot.slane %v958, %v979
        %v982 = vunpack.c.l.s4 1966171168
        %v983 = vunpack.c.0.s8 %v982
        %v984 = vlaneseq
        %v985 = vshrl.u32 %v984, 7
        %v986 = vsub.s32 %v983, %v985
        %v987 = vrot.slane %v959, %v986
        %v988 = vcombine.low %v966, %v973
        %v989 = vcombine.low %v980, %v987
        %v991 = vunpack.c.l.s4 1966171168
        %v992 = vunpack.c.0.s8 %v991
        %v993 = vlaneseq
        %v994 = vshrl.u32 %v993, 7
        %v995 = vsub.s32 %v992, %v994
        %v996 = vrot.slane %v988, %v995
        %v998 = vunpack.c.l.s4 1966171168
        %v999 = vunpack.c.0.s8 %v998
        %v1000 = vlaneseq
        %v1001 = vshrl.u32 %v1000, 7
        %v1002 = vsub.s32 %v999, %v1001
        %v1003 = vrot.slane %v989, %v1002
        %v1004 = vcombine.low %v996, %v1003
        %v1006 = vmul.f32 %v931, %v1004
        %v1008 = vlaneseq
        %v1009 = vshrl.u32 %v1008, 7
        %v1010 = vsub.s32 0, %v1009
        %v1011 = vrot.slane %v1006, %v1010
        %v1012 = vlaneseq
        %v1013 = vshrl.u32 %v1012, 7
        %v1014 = vsub.s32 1, %v1013
        %v1015 = vrot.slane %v1006, %v1014
        %v1016 = vlaneseq
        %v1017 = vshrl.u32 %v1016, 7
        %v1018 = vsub.s32 2, %v1017
        %v1019 = vrot.slane %v1006, %v1018
        %v1020 = vlaneseq
        %v1021 = vshrl.u32 %v1020, 7
        %v1022 = vsub.s32 3, %v1021
        %v1023 = vrot.slane %v1006, %v1022
        %v1024 = vlaneseq
        %v1025 = vshrl.u32 %v1024, 7
        %v1026 = vsub.s32 4, %v1025
        %v1027 = vrot.slane %v1006, %v1026
        %v1028 = vlaneseq
        %v1029 = vshrl.u32 %v1028, 7
        %v1030 = vsub.s32 5, %v1029
        %v1031 = vrot.slane %v1006, %v1030
        %v1032 = vlaneseq
        %v1033 = vshrl.u32 %v1032, 7
        %v1034 = vsub.s32 6, %v1033
        %v1035 = vrot.slane %v1006, %v1034
        %v1036 = vlaneseq
        %v1037 = vshrl.u32 %v1036, 7
        %v1038 = vsub.s32 7, %v1037
        %v1039 = vrot.slane %v1006, %v1038
        %v1048 = vmul.f32 %v851, %v1011
        %v1049 = vmul.f32 %v852, %v1015
        %v1050 = vmul.f32 %v853, %v1019
        %v1051 = vmul.f32 %v854, %v1023
        %v1052 = vmul.f32 %v855, %v1027
        %v1053 = vmul.f32 %v856, %v1031
        %v1054 = vmul.f32 %v857, %v1035
        %v1055 = vmul.f32 %v858, %v1039
        %v1056 = vld [vmem:[#allocation8] sm:$0xff]
        %v1058 = vlaneseq
        %v1059 = vshrl.u32 %v1058, 7
        %v1060 = vsub.s32 0, %v1059
        %v1061 = vrot.slane %v1056, %v1060
        %v1062 = vlaneseq
        %v1063 = vshrl.u32 %v1062, 7
        %v1064 = vsub.s32 1, %v1063
        %v1065 = vrot.slane %v1056, %v1064
        %v1066 = vlaneseq
        %v1067 = vshrl.u32 %v1066, 7
        %v1068 = vsub.s32 2, %v1067
        %v1069 = vrot.slane %v1056, %v1068
        %v1070 = vlaneseq
        %v1071 = vshrl.u32 %v1070, 7
        %v1072 = vsub.s32 3, %v1071
        %v1073 = vrot.slane %v1056, %v1072
        %v1074 = vlaneseq
        %v1075 = vshrl.u32 %v1074, 7
        %v1076 = vsub.s32 4, %v1075
        %v1077 = vrot.slane %v1056, %v1076
        %v1078 = vlaneseq
        %v1079 = vshrl.u32 %v1078, 7
        %v1080 = vsub.s32 5, %v1079
        %v1081 = vrot.slane %v1056, %v1080
        %v1082 = vlaneseq
        %v1083 = vshrl.u32 %v1082, 7
        %v1084 = vsub.s32 6, %v1083
        %v1085 = vrot.slane %v1056, %v1084
        %v1086 = vlaneseq
        %v1087 = vshrl.u32 %v1086, 7
        %v1088 = vsub.s32 7, %v1087
        %v1089 = vrot.slane %v1056, %v1088
        %v1098 = vadd.f32 %v1048, %v1061
        %v1099 = vadd.f32 %v1049, %v1065
        %v1100 = vadd.f32 %v1050, %v1069
        %v1101 = vadd.f32 %v1051, %v1073
        %v1102 = vadd.f32 %v1052, %v1077
        %v1103 = vadd.f32 %v1053, %v1081
        %v1104 = vadd.f32 %v1054, %v1085
        %v1105 = vadd.f32 %v1055, %v1089
        %v1106 = vmax.f32 %v1098, 0.0
        %v1107 = vmax.f32 %v1099, 0.0
        %v1108 = vmax.f32 %v1100, 0.0
        %v1109 = vmax.f32 %v1101, 0.0
        %v1110 = vmax.f32 %v1102, 0.0
        %v1111 = vmax.f32 %v1103, 0.0
        %v1112 = vmax.f32 %v1104, 0.0
        %v1113 = vmax.f32 %v1105, 0.0
        %v1114 = vpack.c.bf16 %v1106, %v1106
        %v1115 = vpack.c.bf16 %v1107, %v1107
        %v1116 = vpack.c.bf16 %v1108, %v1108
        %v1117 = vpack.c.bf16 %v1109, %v1109
        %v1118 = vpack.c.bf16 %v1110, %v1110
        %v1119 = vpack.c.bf16 %v1111, %v1111
        %v1120 = vpack.c.bf16 %v1112, %v1112
        %v1121 = vpack.c.bf16 %v1113, %v1113
        %v1122 = vld [vmem:[%s324] sm:$0xff]
        %v1123 = vld [vmem:[%s324 + $0x8] sm:$0xff]
        %v1124 = vld [vmem:[%s324 + $0x10] sm:$0xff]
        %v1125 = vld [vmem:[%s324 + $0x18] sm:$0xff]
        %v1126 = vld [vmem:[%s324 + $0x20] sm:$0xff]
        %v1127 = vld [vmem:[%s324 + $0x28] sm:$0xff]
        %v1128 = vld [vmem:[%s324 + $0x30] sm:$0xff]
        %v1129 = vld [vmem:[%s324 + $0x38] sm:$0xff]
        %v1130 = vld [vmem:[%s324 + $0x40] sm:$0xff]
        %v1131 = vld [vmem:[%s324 + $0x48] sm:$0xff]
        %v1132 = vld [vmem:[%s324 + $0x50] sm:$0xff]
        %v1133 = vld [vmem:[%s324 + $0x58] sm:$0xff]
        %v1134 = vld [vmem:[%s324 + $0x60] sm:$0xff]
        %v1135 = vld [vmem:[%s324 + $0x68] sm:$0xff]
        %v1136 = vld [vmem:[%s324 + $0x70] sm:$0xff]
        %v1137 = vld [vmem:[%s324 + $0x78] sm:$0xff]
        %v1138 = vld [vmem:[%s324 + $0x80] sm:$0xff]
        %v1139 = vld [vmem:[%s324 + $0x88] sm:$0xff]
        %v1140 = vld [vmem:[%s324 + $0x90] sm:$0xff]
        %v1141 = vld [vmem:[%s324 + $0x98] sm:$0xff]
        %v1142 = vld [vmem:[%s324 + $0xa0] sm:$0xff]
        %v1143 = vld [vmem:[%s324 + $0xa8] sm:$0xff]
        %v1144 = vld [vmem:[%s324 + $0xb0] sm:$0xff]
        %v1145 = vld [vmem:[%s324 + $0xb8] sm:$0xff]
        %v1146 = vld [vmem:[%s324 + $0xc0] sm:$0xff]
        %v1147 = vld [vmem:[%s324 + $0xc8] sm:$0xff]
        %v1148 = vld [vmem:[%s324 + $0xd0] sm:$0xff]
        %v1149 = vld [vmem:[%s324 + $0xd8] sm:$0xff]
        %v1150 = vld [vmem:[%s324 + $0xe0] sm:$0xff]
        %v1151 = vld [vmem:[%s324 + $0xe8] sm:$0xff]
        %v1152 = vld [vmem:[%s324 + $0xf0] sm:$0xff]
        %v1153 = vld [vmem:[%s324 + $0xf8] sm:$0xff]
        %v1154 = vld [vmem:[%s324 + $0x100] sm:$0xff]
        %v1155 = vld [vmem:[%s324 + $0x108] sm:$0xff]
        %v1156 = vld [vmem:[%s324 + $0x110] sm:$0xff]
        %v1157 = vld [vmem:[%s324 + $0x118] sm:$0xff]
        %v1158 = vld [vmem:[%s324 + $0x120] sm:$0xff]
        %v1159 = vld [vmem:[%s324 + $0x128] sm:$0xff]
        %v1160 = vld [vmem:[%s324 + $0x130] sm:$0xff]
        %v1161 = vld [vmem:[%s324 + $0x138] sm:$0xff]
        %v1162 = vld [vmem:[%s324 + $0x140] sm:$0xff]
        %v1163 = vld [vmem:[%s324 + $0x148] sm:$0xff]
        %v1164 = vld [vmem:[%s324 + $0x150] sm:$0xff]
        %v1165 = vld [vmem:[%s324 + $0x158] sm:$0xff]
        %v1166 = vld [vmem:[%s324 + $0x160] sm:$0xff]
        %v1167 = vld [vmem:[%s324 + $0x168] sm:$0xff]
        %v1168 = vld [vmem:[%s324 + $0x170] sm:$0xff]
        %v1169 = vld [vmem:[%s324 + $0x178] sm:$0xff]
        %v1170 = vld [vmem:[%s324 + $0x180] sm:$0xff]
        %v1171 = vld [vmem:[%s324 + $0x188] sm:$0xff]
        %v1172 = vld [vmem:[%s324 + $0x190] sm:$0xff]
        %v1173 = vld [vmem:[%s324 + $0x198] sm:$0xff]
        %v1174 = vld [vmem:[%s324 + $0x1a0] sm:$0xff]
        %v1175 = vld [vmem:[%s324 + $0x1a8] sm:$0xff]
        %v1176 = vld [vmem:[%s324 + $0x1b0] sm:$0xff]
        %v1177 = vld [vmem:[%s324 + $0x1b8] sm:$0xff]
        %v1178 = vld [vmem:[%s324 + $0x1c0] sm:$0xff]
        %v1179 = vld [vmem:[%s324 + $0x1c8] sm:$0xff]
        %v1180 = vld [vmem:[%s324 + $0x1d0] sm:$0xff]
        %v1181 = vld [vmem:[%s324 + $0x1d8] sm:$0xff]
        %v1182 = vld [vmem:[%s324 + $0x1e0] sm:$0xff]
        %v1183 = vld [vmem:[%s324 + $0x1e8] sm:$0xff]
        %v1184 = vld [vmem:[%s324 + $0x1f0] sm:$0xff]
        %v1185 = vld [vmem:[%s324 + $0x1f8] sm:$0xff]
        %v1186 = vld [vmem:[%s324 + $0x200] sm:$0xff]
        %v1187 = vld [vmem:[%s324 + $0x208] sm:$0xff]
        %v1188 = vld [vmem:[%s324 + $0x210] sm:$0xff]
        %v1189 = vld [vmem:[%s324 + $0x218] sm:$0xff]
        %v1190 = vld [vmem:[%s324 + $0x220] sm:$0xff]
        %v1191 = vld [vmem:[%s324 + $0x228] sm:$0xff]
        %v1192 = vld [vmem:[%s324 + $0x230] sm:$0xff]
        %v1193 = vld [vmem:[%s324 + $0x238] sm:$0xff]
        %v1194 = vld [vmem:[%s324 + $0x240] sm:$0xff]
        %v1195 = vld [vmem:[%s324 + $0x248] sm:$0xff]
        %v1196 = vld [vmem:[%s324 + $0x250] sm:$0xff]
        %v1197 = vld [vmem:[%s324 + $0x258] sm:$0xff]
        %v1198 = vld [vmem:[%s324 + $0x260] sm:$0xff]
        %v1199 = vld [vmem:[%s324 + $0x268] sm:$0xff]
        %v1200 = vld [vmem:[%s324 + $0x270] sm:$0xff]
        %v1201 = vld [vmem:[%s324 + $0x278] sm:$0xff]
        %v1202 = vld [vmem:[%s324 + $0x280] sm:$0xff]
        %v1203 = vld [vmem:[%s324 + $0x288] sm:$0xff]
        %v1204 = vld [vmem:[%s324 + $0x290] sm:$0xff]
        %v1205 = vld [vmem:[%s324 + $0x298] sm:$0xff]
        %v1206 = vld [vmem:[%s324 + $0x2a0] sm:$0xff]
        %v1207 = vld [vmem:[%s324 + $0x2a8] sm:$0xff]
        %v1208 = vld [vmem:[%s324 + $0x2b0] sm:$0xff]
        %v1209 = vld [vmem:[%s324 + $0x2b8] sm:$0xff]
        %v1210 = vld [vmem:[%s324 + $0x2c0] sm:$0xff]
        %v1211 = vld [vmem:[%s324 + $0x2c8] sm:$0xff]
        %v1212 = vld [vmem:[%s324 + $0x2d0] sm:$0xff]
        %v1213 = vld [vmem:[%s324 + $0x2d8] sm:$0xff]
        %v1214 = vld [vmem:[%s324 + $0x2e0] sm:$0xff]
        %v1215 = vld [vmem:[%s324 + $0x2e8] sm:$0xff]
        %v1216 = vld [vmem:[%s324 + $0x2f0] sm:$0xff]
        %v1217 = vld [vmem:[%s324 + $0x2f8] sm:$0xff]
        %v1218 = vld [vmem:[%s324 + $0x300] sm:$0xff]
        %v1219 = vld [vmem:[%s324 + $0x308] sm:$0xff]
        %v1220 = vld [vmem:[%s324 + $0x310] sm:$0xff]
        %v1221 = vld [vmem:[%s324 + $0x318] sm:$0xff]
        %v1222 = vld [vmem:[%s324 + $0x320] sm:$0xff]
        %v1223 = vld [vmem:[%s324 + $0x328] sm:$0xff]
        %v1224 = vld [vmem:[%s324 + $0x330] sm:$0xff]
        %v1225 = vld [vmem:[%s324 + $0x338] sm:$0xff]
        %v1226 = vld [vmem:[%s324 + $0x340] sm:$0xff]
        %v1227 = vld [vmem:[%s324 + $0x348] sm:$0xff]
        %v1228 = vld [vmem:[%s324 + $0x350] sm:$0xff]
        %v1229 = vld [vmem:[%s324 + $0x358] sm:$0xff]
        %v1230 = vld [vmem:[%s324 + $0x360] sm:$0xff]
        %v1231 = vld [vmem:[%s324 + $0x368] sm:$0xff]
        %v1232 = vld [vmem:[%s324 + $0x370] sm:$0xff]
        %v1233 = vld [vmem:[%s324 + $0x378] sm:$0xff]
        %v1234 = vld [vmem:[%s324 + $0x380] sm:$0xff]
        %v1235 = vld [vmem:[%s324 + $0x388] sm:$0xff]
        %v1236 = vld [vmem:[%s324 + $0x390] sm:$0xff]
        %v1237 = vld [vmem:[%s324 + $0x398] sm:$0xff]
        %v1238 = vld [vmem:[%s324 + $0x3a0] sm:$0xff]
        %v1239 = vld [vmem:[%s324 + $0x3a8] sm:$0xff]
        %v1240 = vld [vmem:[%s324 + $0x3b0] sm:$0xff]
        %v1241 = vld [vmem:[%s324 + $0x3b8] sm:$0xff]
        %v1242 = vld [vmem:[%s324 + $0x3c0] sm:$0xff]
        %v1243 = vld [vmem:[%s324 + $0x3c8] sm:$0xff]
        %v1244 = vld [vmem:[%s324 + $0x3d0] sm:$0xff]
        %v1245 = vld [vmem:[%s324 + $0x3d8] sm:$0xff]
        %v1246 = vld [vmem:[%s324 + $0x3e0] sm:$0xff]
        %v1247 = vld [vmem:[%s324 + $0x3e8] sm:$0xff]
        %v1248 = vld [vmem:[%s324 + $0x3f0] sm:$0xff]
        %v1249 = vld [vmem:[%s324 + $0x3f8] sm:$0xff]
        %v1250 = vld [vmem:[%s363] sm:$0x3]
        %v1252 = vlaneseq
        %v1253 = vshrl.u32 %v1252, 7
        %v1254 = vsub.s32 0, %v1253
        %v1255 = vrot.slane %v1250, %v1254
        %v1256 = vlaneseq
        %v1257 = vshrl.u32 %v1256, 7
        %v1258 = vsub.s32 1, %v1257
        %v1259 = vrot.slane %v1250, %v1258
        %v1390 = vunpack.c.l.b16 %v1122
        %v1391 = vunpack.c.h.b16 %v1122
        %v1392 = vunpack.c.l.b16 %v1123
        %v1393 = vunpack.c.h.b16 %v1123
        %v1394 = vunpack.c.l.b16 %v1124
        %v1395 = vunpack.c.h.b16 %v1124
        %v1396 = vunpack.c.l.b16 %v1125
        %v1397 = vunpack.c.h.b16 %v1125
        %v1398 = vunpack.c.l.b16 %v1126
        %v1399 = vunpack.c.h.b16 %v1126
        %v1400 = vunpack.c.l.b16 %v1127
        %v1401 = vunpack.c.h.b16 %v1127
        %v1402 = vunpack.c.l.b16 %v1128
        %v1403 = vunpack.c.h.b16 %v1128
        %v1404 = vunpack.c.l.b16 %v1129
        %v1405 = vunpack.c.h.b16 %v1129
        %v1406 = vunpack.c.l.b16 %v1130
        %v1407 = vunpack.c.h.b16 %v1130
        %v1408 = vunpack.c.l.b16 %v1131
        %v1409 = vunpack.c.h.b16 %v1131
        %v1410 = vunpack.c.l.b16 %v1132
        %v1411 = vunpack.c.h.b16 %v1132
        %v1412 = vunpack.c.l.b16 %v1133
        %v1413 = vunpack.c.h.b16 %v1133
        %v1414 = vunpack.c.l.b16 %v1134
        %v1415 = vunpack.c.h.b16 %v1134
        %v1416 = vunpack.c.l.b16 %v1135
        %v1417 = vunpack.c.h.b16 %v1135
        %v1418 = vunpack.c.l.b16 %v1136
        %v1419 = vunpack.c.h.b16 %v1136
        %v1420 = vunpack.c.l.b16 %v1137
        %v1421 = vunpack.c.h.b16 %v1137
        %v1422 = vunpack.c.l.b16 %v1138
        %v1423 = vunpack.c.h.b16 %v1138
        %v1424 = vunpack.c.l.b16 %v1139
        %v1425 = vunpack.c.h.b16 %v1139
        %v1426 = vunpack.c.l.b16 %v1140
        %v1427 = vunpack.c.h.b16 %v1140
        %v1428 = vunpack.c.l.b16 %v1141
        %v1429 = vunpack.c.h.b16 %v1141
        %v1430 = vunpack.c.l.b16 %v1142
        %v1431 = vunpack.c.h.b16 %v1142
        %v1432 = vunpack.c.l.b16 %v1143
        %v1433 = vunpack.c.h.b16 %v1143
        %v1434 = vunpack.c.l.b16 %v1144
        %v1435 = vunpack.c.h.b16 %v1144
        %v1436 = vunpack.c.l.b16 %v1145
        %v1437 = vunpack.c.h.b16 %v1145
        %v1438 = vunpack.c.l.b16 %v1146
        %v1439 = vunpack.c.h.b16 %v1146
        %v1440 = vunpack.c.l.b16 %v1147
        %v1441 = vunpack.c.h.b16 %v1147
        %v1442 = vunpack.c.l.b16 %v1148
        %v1443 = vunpack.c.h.b16 %v1148
        %v1444 = vunpack.c.l.b16 %v1149
        %v1445 = vunpack.c.h.b16 %v1149
        %v1446 = vunpack.c.l.b16 %v1150
        %v1447 = vunpack.c.h.b16 %v1150
        %v1448 = vunpack.c.l.b16 %v1151
        %v1449 = vunpack.c.h.b16 %v1151
        %v1450 = vunpack.c.l.b16 %v1152
        %v1451 = vunpack.c.h.b16 %v1152
        %v1452 = vunpack.c.l.b16 %v1153
        %v1453 = vunpack.c.h.b16 %v1153
        %v1454 = vunpack.c.l.b16 %v1154
        %v1455 = vunpack.c.h.b16 %v1154
        %v1456 = vunpack.c.l.b16 %v1155
        %v1457 = vunpack.c.h.b16 %v1155
        %v1458 = vunpack.c.l.b16 %v1156
        %v1459 = vunpack.c.h.b16 %v1156
        %v1460 = vunpack.c.l.b16 %v1157
        %v1461 = vunpack.c.h.b16 %v1157
        %v1462 = vunpack.c.l.b16 %v1158
        %v1463 = vunpack.c.h.b16 %v1158
        %v1464 = vunpack.c.l.b16 %v1159
        %v1465 = vunpack.c.h.b16 %v1159
        %v1466 = vunpack.c.l.b16 %v1160
        %v1467 = vunpack.c.h.b16 %v1160
        %v1468 = vunpack.c.l.b16 %v1161
        %v1469 = vunpack.c.h.b16 %v1161
        %v1470 = vunpack.c.l.b16 %v1162
        %v1471 = vunpack.c.h.b16 %v1162
        %v1472 = vunpack.c.l.b16 %v1163
        %v1473 = vunpack.c.h.b16 %v1163
        %v1474 = vunpack.c.l.b16 %v1164
        %v1475 = vunpack.c.h.b16 %v1164
        %v1476 = vunpack.c.l.b16 %v1165
        %v1477 = vunpack.c.h.b16 %v1165
        %v1478 = vunpack.c.l.b16 %v1166
        %v1479 = vunpack.c.h.b16 %v1166
        %v1480 = vunpack.c.l.b16 %v1167
        %v1481 = vunpack.c.h.b16 %v1167
        %v1482 = vunpack.c.l.b16 %v1168
        %v1483 = vunpack.c.h.b16 %v1168
        %v1484 = vunpack.c.l.b16 %v1169
        %v1485 = vunpack.c.h.b16 %v1169
        %v1486 = vunpack.c.l.b16 %v1170
        %v1487 = vunpack.c.h.b16 %v1170
        %v1488 = vunpack.c.l.b16 %v1171
        %v1489 = vunpack.c.h.b16 %v1171
        %v1490 = vunpack.c.l.b16 %v1172
        %v1491 = vunpack.c.h.b16 %v1172
        %v1492 = vunpack.c.l.b16 %v1173
        %v1493 = vunpack.c.h.b16 %v1173
        %v1494 = vunpack.c.l.b16 %v1174
        %v1495 = vunpack.c.h.b16 %v1174
        %v1496 = vunpack.c.l.b16 %v1175
        %v1497 = vunpack.c.h.b16 %v1175
        %v1498 = vunpack.c.l.b16 %v1176
        %v1499 = vunpack.c.h.b16 %v1176
        %v1500 = vunpack.c.l.b16 %v1177
        %v1501 = vunpack.c.h.b16 %v1177
        %v1502 = vunpack.c.l.b16 %v1178
        %v1503 = vunpack.c.h.b16 %v1178
        %v1504 = vunpack.c.l.b16 %v1179
        %v1505 = vunpack.c.h.b16 %v1179
        %v1506 = vunpack.c.l.b16 %v1180
        %v1507 = vunpack.c.h.b16 %v1180
        %v1508 = vunpack.c.l.b16 %v1181
        %v1509 = vunpack.c.h.b16 %v1181
        %v1510 = vunpack.c.l.b16 %v1182
        %v1511 = vunpack.c.h.b16 %v1182
        %v1512 = vunpack.c.l.b16 %v1183
        %v1513 = vunpack.c.h.b16 %v1183
        %v1514 = vunpack.c.l.b16 %v1184
        %v1515 = vunpack.c.h.b16 %v1184
        %v1516 = vunpack.c.l.b16 %v1185
        %v1517 = vunpack.c.h.b16 %v1185
        %v1518 = vunpack.c.l.b16 %v1186
        %v1519 = vunpack.c.h.b16 %v1186
        %v1520 = vunpack.c.l.b16 %v1187
        %v1521 = vunpack.c.h.b16 %v1187
        %v1522 = vunpack.c.l.b16 %v1188
        %v1523 = vunpack.c.h.b16 %v1188
        %v1524 = vunpack.c.l.b16 %v1189
        %v1525 = vunpack.c.h.b16 %v1189
        %v1526 = vunpack.c.l.b16 %v1190
        %v1527 = vunpack.c.h.b16 %v1190
        %v1528 = vunpack.c.l.b16 %v1191
        %v1529 = vunpack.c.h.b16 %v1191
        %v1530 = vunpack.c.l.b16 %v1192
        %v1531 = vunpack.c.h.b16 %v1192
        %v1532 = vunpack.c.l.b16 %v1193
        %v1533 = vunpack.c.h.b16 %v1193
        %v1534 = vunpack.c.l.b16 %v1194
        %v1535 = vunpack.c.h.b16 %v1194
        %v1536 = vunpack.c.l.b16 %v1195
        %v1537 = vunpack.c.h.b16 %v1195
        %v1538 = vunpack.c.l.b16 %v1196
        %v1539 = vunpack.c.h.b16 %v1196
        %v1540 = vunpack.c.l.b16 %v1197
        %v1541 = vunpack.c.h.b16 %v1197
        %v1542 = vunpack.c.l.b16 %v1198
        %v1543 = vunpack.c.h.b16 %v1198
        %v1544 = vunpack.c.l.b16 %v1199
        %v1545 = vunpack.c.h.b16 %v1199
        %v1546 = vunpack.c.l.b16 %v1200
        %v1547 = vunpack.c.h.b16 %v1200
        %v1548 = vunpack.c.l.b16 %v1201
        %v1549 = vunpack.c.h.b16 %v1201
        %v1550 = vunpack.c.l.b16 %v1202
        %v1551 = vunpack.c.h.b16 %v1202
        %v1552 = vunpack.c.l.b16 %v1203
        %v1553 = vunpack.c.h.b16 %v1203
        %v1554 = vunpack.c.l.b16 %v1204
        %v1555 = vunpack.c.h.b16 %v1204
        %v1556 = vunpack.c.l.b16 %v1205
        %v1557 = vunpack.c.h.b16 %v1205
        %v1558 = vunpack.c.l.b16 %v1206
        %v1559 = vunpack.c.h.b16 %v1206
        %v1560 = vunpack.c.l.b16 %v1207
        %v1561 = vunpack.c.h.b16 %v1207
        %v1562 = vunpack.c.l.b16 %v1208
        %v1563 = vunpack.c.h.b16 %v1208
        %v1564 = vunpack.c.l.b16 %v1209
        %v1565 = vunpack.c.h.b16 %v1209
        %v1566 = vunpack.c.l.b16 %v1210
        %v1567 = vunpack.c.h.b16 %v1210
        %v1568 = vunpack.c.l.b16 %v1211
        %v1569 = vunpack.c.h.b16 %v1211
        %v1570 = vunpack.c.l.b16 %v1212
        %v1571 = vunpack.c.h.b16 %v1212
        %v1572 = vunpack.c.l.b16 %v1213
        %v1573 = vunpack.c.h.b16 %v1213
        %v1574 = vunpack.c.l.b16 %v1214
        %v1575 = vunpack.c.h.b16 %v1214
        %v1576 = vunpack.c.l.b16 %v1215
        %v1577 = vunpack.c.h.b16 %v1215
        %v1578 = vunpack.c.l.b16 %v1216
        %v1579 = vunpack.c.h.b16 %v1216
        %v1580 = vunpack.c.l.b16 %v1217
        %v1581 = vunpack.c.h.b16 %v1217
        %v1582 = vunpack.c.l.b16 %v1218
        %v1583 = vunpack.c.h.b16 %v1218
        %v1584 = vunpack.c.l.b16 %v1219
        %v1585 = vunpack.c.h.b16 %v1219
        %v1586 = vunpack.c.l.b16 %v1220
        %v1587 = vunpack.c.h.b16 %v1220
        %v1588 = vunpack.c.l.b16 %v1221
        %v1589 = vunpack.c.h.b16 %v1221
        %v1590 = vunpack.c.l.b16 %v1222
        %v1591 = vunpack.c.h.b16 %v1222
        %v1592 = vunpack.c.l.b16 %v1223
        %v1593 = vunpack.c.h.b16 %v1223
        %v1594 = vunpack.c.l.b16 %v1224
        %v1595 = vunpack.c.h.b16 %v1224
        %v1596 = vunpack.c.l.b16 %v1225
        %v1597 = vunpack.c.h.b16 %v1225
        %v1598 = vunpack.c.l.b16 %v1226
        %v1599 = vunpack.c.h.b16 %v1226
        %v1600 = vunpack.c.l.b16 %v1227
        %v1601 = vunpack.c.h.b16 %v1227
        %v1602 = vunpack.c.l.b16 %v1228
        %v1603 = vunpack.c.h.b16 %v1228
        %v1604 = vunpack.c.l.b16 %v1229
        %v1605 = vunpack.c.h.b16 %v1229
        %v1606 = vunpack.c.l.b16 %v1230
        %v1607 = vunpack.c.h.b16 %v1230
        %v1608 = vunpack.c.l.b16 %v1231
        %v1609 = vunpack.c.h.b16 %v1231
        %v1610 = vunpack.c.l.b16 %v1232
        %v1611 = vunpack.c.h.b16 %v1232
        %v1612 = vunpack.c.l.b16 %v1233
        %v1613 = vunpack.c.h.b16 %v1233
        %v1614 = vunpack.c.l.b16 %v1234
        %v1615 = vunpack.c.h.b16 %v1234
        %v1616 = vunpack.c.l.b16 %v1235
        %v1617 = vunpack.c.h.b16 %v1235
        %v1618 = vunpack.c.l.b16 %v1236
        %v1619 = vunpack.c.h.b16 %v1236
        %v1620 = vunpack.c.l.b16 %v1237
        %v1621 = vunpack.c.h.b16 %v1237
        %v1622 = vunpack.c.l.b16 %v1238
        %v1623 = vunpack.c.h.b16 %v1238
        %v1624 = vunpack.c.l.b16 %v1239
        %v1625 = vunpack.c.h.b16 %v1239
        %v1626 = vunpack.c.l.b16 %v1240
        %v1627 = vunpack.c.h.b16 %v1240
        %v1628 = vunpack.c.l.b16 %v1241
        %v1629 = vunpack.c.h.b16 %v1241
        %v1630 = vunpack.c.l.b16 %v1242
        %v1631 = vunpack.c.h.b16 %v1242
        %v1632 = vunpack.c.l.b16 %v1243
        %v1633 = vunpack.c.h.b16 %v1243
        %v1634 = vunpack.c.l.b16 %v1244
        %v1635 = vunpack.c.h.b16 %v1244
        %v1636 = vunpack.c.l.b16 %v1245
        %v1637 = vunpack.c.h.b16 %v1245
        %v1638 = vunpack.c.l.b16 %v1246
        %v1639 = vunpack.c.h.b16 %v1246
        %v1640 = vunpack.c.l.b16 %v1247
        %v1641 = vunpack.c.h.b16 %v1247
        %v1642 = vunpack.c.l.b16 %v1248
        %v1643 = vunpack.c.h.b16 %v1248
        %v1644 = vunpack.c.l.b16 %v1249
        %v1645 = vunpack.c.h.b16 %v1249
        %v1646 = vpack.c.b16 %v1392, %v1390
        %v1647 = vpack.c.b16 %v1393, %v1391
        %v1648 = vpack.c.b16 %v1396, %v1394
        %v1649 = vpack.c.b16 %v1397, %v1395
        %v1650 = vpack.c.b16 %v1400, %v1398
        %v1651 = vpack.c.b16 %v1401, %v1399
        %v1652 = vpack.c.b16 %v1404, %v1402
        %v1653 = vpack.c.b16 %v1405, %v1403
        %v1654 = vpack.c.b16 %v1408, %v1406
        %v1655 = vpack.c.b16 %v1409, %v1407
        %v1656 = vpack.c.b16 %v1412, %v1410
        %v1657 = vpack.c.b16 %v1413, %v1411
        %v1658 = vpack.c.b16 %v1416, %v1414
        %v1659 = vpack.c.b16 %v1417, %v1415
        %v1660 = vpack.c.b16 %v1420, %v1418
        %v1661 = vpack.c.b16 %v1421, %v1419
        %v1662 = vpack.c.b16 %v1424, %v1422
        %v1663 = vpack.c.b16 %v1425, %v1423
        %v1664 = vpack.c.b16 %v1428, %v1426
        %v1665 = vpack.c.b16 %v1429, %v1427
        %v1666 = vpack.c.b16 %v1432, %v1430
        %v1667 = vpack.c.b16 %v1433, %v1431
        %v1668 = vpack.c.b16 %v1436, %v1434
        %v1669 = vpack.c.b16 %v1437, %v1435
        %v1670 = vpack.c.b16 %v1440, %v1438
        %v1671 = vpack.c.b16 %v1441, %v1439
        %v1672 = vpack.c.b16 %v1444, %v1442
        %v1673 = vpack.c.b16 %v1445, %v1443
        %v1674 = vpack.c.b16 %v1448, %v1446
        %v1675 = vpack.c.b16 %v1449, %v1447
        %v1676 = vpack.c.b16 %v1452, %v1450
        %v1677 = vpack.c.b16 %v1453, %v1451
        %v1678 = vpack.c.b16 %v1456, %v1454
        %v1679 = vpack.c.b16 %v1457, %v1455
        %v1680 = vpack.c.b16 %v1460, %v1458
        %v1681 = vpack.c.b16 %v1461, %v1459
        %v1682 = vpack.c.b16 %v1464, %v1462
        %v1683 = vpack.c.b16 %v1465, %v1463
        %v1684 = vpack.c.b16 %v1468, %v1466
        %v1685 = vpack.c.b16 %v1469, %v1467
        %v1686 = vpack.c.b16 %v1472, %v1470
        %v1687 = vpack.c.b16 %v1473, %v1471
        %v1688 = vpack.c.b16 %v1476, %v1474
        %v1689 = vpack.c.b16 %v1477, %v1475
        %v1690 = vpack.c.b16 %v1480, %v1478
        %v1691 = vpack.c.b16 %v1481, %v1479
        %v1692 = vpack.c.b16 %v1484, %v1482
        %v1693 = vpack.c.b16 %v1485, %v1483
        %v1694 = vpack.c.b16 %v1488, %v1486
        %v1695 = vpack.c.b16 %v1489, %v1487
        %v1696 = vpack.c.b16 %v1492, %v1490
        %v1697 = vpack.c.b16 %v1493, %v1491
        %v1698 = vpack.c.b16 %v1496, %v1494
        %v1699 = vpack.c.b16 %v1497, %v1495
        %v1700 = vpack.c.b16 %v1500, %v1498
        %v1701 = vpack.c.b16 %v1501, %v1499
        %v1702 = vpack.c.b16 %v1504, %v1502
        %v1703 = vpack.c.b16 %v1505, %v1503
        %v1704 = vpack.c.b16 %v1508, %v1506
        %v1705 = vpack.c.b16 %v1509, %v1507
        %v1706 = vpack.c.b16 %v1512, %v1510
        %v1707 = vpack.c.b16 %v1513, %v1511
        %v1708 = vpack.c.b16 %v1516, %v1514
        %v1709 = vpack.c.b16 %v1517, %v1515
        %v1710 = vpack.c.b16 %v1520, %v1518
        %v1711 = vpack.c.b16 %v1521, %v1519
        %v1712 = vpack.c.b16 %v1524, %v1522
        %v1713 = vpack.c.b16 %v1525, %v1523
        %v1714 = vpack.c.b16 %v1528, %v1526
        %v1715 = vpack.c.b16 %v1529, %v1527
        %v1716 = vpack.c.b16 %v1532, %v1530
        %v1717 = vpack.c.b16 %v1533, %v1531
        %v1718 = vpack.c.b16 %v1536, %v1534
        %v1719 = vpack.c.b16 %v1537, %v1535
        %v1720 = vpack.c.b16 %v1540, %v1538
        %v1721 = vpack.c.b16 %v1541, %v1539
        %v1722 = vpack.c.b16 %v1544, %v1542
        %v1723 = vpack.c.b16 %v1545, %v1543
        %v1724 = vpack.c.b16 %v1548, %v1546
        %v1725 = vpack.c.b16 %v1549, %v1547
        %v1726 = vpack.c.b16 %v1552, %v1550
        %v1727 = vpack.c.b16 %v1553, %v1551
        %v1728 = vpack.c.b16 %v1556, %v1554
        %v1729 = vpack.c.b16 %v1557, %v1555
        %v1730 = vpack.c.b16 %v1560, %v1558
        %v1731 = vpack.c.b16 %v1561, %v1559
        %v1732 = vpack.c.b16 %v1564, %v1562
        %v1733 = vpack.c.b16 %v1565, %v1563
        %v1734 = vpack.c.b16 %v1568, %v1566
        %v1735 = vpack.c.b16 %v1569, %v1567
        %v1736 = vpack.c.b16 %v1572, %v1570
        %v1737 = vpack.c.b16 %v1573, %v1571
        %v1738 = vpack.c.b16 %v1576, %v1574
        %v1739 = vpack.c.b16 %v1577, %v1575
        %v1740 = vpack.c.b16 %v1580, %v1578
        %v1741 = vpack.c.b16 %v1581, %v1579
        %v1742 = vpack.c.b16 %v1584, %v1582
        %v1743 = vpack.c.b16 %v1585, %v1583
        %v1744 = vpack.c.b16 %v1588, %v1586
        %v1745 = vpack.c.b16 %v1589, %v1587
        %v1746 = vpack.c.b16 %v1592, %v1590
        %v1747 = vpack.c.b16 %v1593, %v1591
        %v1748 = vpack.c.b16 %v1596, %v1594
        %v1749 = vpack.c.b16 %v1597, %v1595
        %v1750 = vpack.c.b16 %v1600, %v1598
        %v1751 = vpack.c.b16 %v1601, %v1599
        %v1752 = vpack.c.b16 %v1604, %v1602
        %v1753 = vpack.c.b16 %v1605, %v1603
        %v1754 = vpack.c.b16 %v1608, %v1606
        %v1755 = vpack.c.b16 %v1609, %v1607
        %v1756 = vpack.c.b16 %v1612, %v1610
        %v1757 = vpack.c.b16 %v1613, %v1611
        %v1758 = vpack.c.b16 %v1616, %v1614
        %v1759 = vpack.c.b16 %v1617, %v1615
        %v1760 = vpack.c.b16 %v1620, %v1618
        %v1761 = vpack.c.b16 %v1621, %v1619
        %v1762 = vpack.c.b16 %v1624, %v1622
        %v1763 = vpack.c.b16 %v1625, %v1623
        %v1764 = vpack.c.b16 %v1628, %v1626
        %v1765 = vpack.c.b16 %v1629, %v1627
        %v1766 = vpack.c.b16 %v1632, %v1630
        %v1767 = vpack.c.b16 %v1633, %v1631
        %v1768 = vpack.c.b16 %v1636, %v1634
        %v1769 = vpack.c.b16 %v1637, %v1635
        %v1770 = vpack.c.b16 %v1640, %v1638
        %v1771 = vpack.c.b16 %v1641, %v1639
        %v1772 = vpack.c.b16 %v1644, %v1642
        %v1773 = vpack.c.b16 %v1645, %v1643
        %1902 = vmatprep.subr.bf16.mxu0 %v1647
        %1903 = vmatpush1.bf16.msra.mxu0 %v1646
        %1904 = vmatprep.subr.bf16.mxu0 %v1649
        %1905 = vmatpush1.bf16.msra.mxu0 %v1648
        %1906 = vmatprep.subr.bf16.mxu0 %v1651
        %1907 = vmatpush1.bf16.msra.mxu0 %v1650
        %1908 = vmatprep.subr.bf16.mxu0 %v1653
        %1909 = vmatpush1.bf16.msra.mxu0 %v1652
        %1910 = vmatprep.subr.bf16.mxu0 %v1655
        %1911 = vmatpush1.bf16.msra.mxu0 %v1654
        %1912 = vmatprep.subr.bf16.mxu0 %v1657
        %1913 = vmatpush1.bf16.msra.mxu0 %v1656
        %1914 = vmatprep.subr.bf16.mxu0 %v1659
        %1915 = vmatpush1.bf16.msra.mxu0 %v1658
        %1916 = vmatprep.subr.bf16.mxu0 %v1661
        %1917 = vmatpush1.bf16.msra.mxu0 %v1660
        %1918 = vmatprep.subr.bf16.mxu0 %v1663
        %1919 = vmatpush1.bf16.msra.mxu0 %v1662
        %1920 = vmatprep.subr.bf16.mxu0 %v1665
        %1921 = vmatpush1.bf16.msra.mxu0 %v1664
        %1922 = vmatprep.subr.bf16.mxu0 %v1667
        %1923 = vmatpush1.bf16.msra.mxu0 %v1666
        %1924 = vmatprep.subr.bf16.mxu0 %v1669
        %1925 = vmatpush1.bf16.msra.mxu0 %v1668
        %1926 = vmatprep.subr.bf16.mxu0 %v1671
        %1927 = vmatpush1.bf16.msra.mxu0 %v1670
        %1928 = vmatprep.subr.bf16.mxu0 %v1673
        %1929 = vmatpush1.bf16.msra.mxu0 %v1672
        %1930 = vmatprep.subr.bf16.mxu0 %v1675
        %1931 = vmatpush1.bf16.msra.mxu0 %v1674
        %1932 = vmatprep.subr.bf16.mxu0 %v1677
        %1933 = vmatpush1.bf16.msra.mxu0 %v1676
        %1934 = vmatprep.mubr.bf16.mxu0 %v1115
        %1935 = vmatmul.mubr.bf16.gmra.mrb[0].mxu0 %v1114
        %v1936 = vpop.f32.mrb[0].mxu0
        %v1937 = vadd.f32 %v1255, %v1936
        %v1938 = vpop.f32.mrb[0].mxu0
        %v1939 = vadd.f32 %v1259, %v1938
        %v1940 = vpop.f32.mrb[0].mxu0
        %v1941 = vpop.f32.mrb[0].mxu0
        %1942 = vdwg.mxu0
        %1943 = vmatprep.subr.bf16.mxu0 %v1679
        %1944 = vmatpush1.bf16.msra.mxu0 %v1678
        %1945 = vmatprep.subr.bf16.mxu0 %v1681
        %1946 = vmatpush1.bf16.msra.mxu0 %v1680
        %1947 = vmatprep.subr.bf16.mxu0 %v1683
        %1948 = vmatpush1.bf16.msra.mxu0 %v1682
        %1949 = vmatprep.subr.bf16.mxu0 %v1685
        %1950 = vmatpush1.bf16.msra.mxu0 %v1684
        %1951 = vmatprep.subr.bf16.mxu0 %v1687
        %1952 = vmatpush1.bf16.msra.mxu0 %v1686
        %1953 = vmatprep.subr.bf16.mxu0 %v1689
        %1954 = vmatpush1.bf16.msra.mxu0 %v1688
        %1955 = vmatprep.subr.bf16.mxu0 %v1691
        %1956 = vmatpush1.bf16.msra.mxu0 %v1690
        %1957 = vmatprep.subr.bf16.mxu0 %v1693
        %1958 = vmatpush1.bf16.msra.mxu0 %v1692
        %1959 = vmatprep.subr.bf16.mxu0 %v1695
        %1960 = vmatpush1.bf16.msra.mxu0 %v1694
        %1961 = vmatprep.subr.bf16.mxu0 %v1697
        %1962 = vmatpush1.bf16.msra.mxu0 %v1696
        %1963 = vmatprep.subr.bf16.mxu0 %v1699
        %1964 = vmatpush1.bf16.msra.mxu0 %v1698
        %1965 = vmatprep.subr.bf16.mxu0 %v1701
        %1966 = vmatpush1.bf16.msra.mxu0 %v1700
        %1967 = vmatprep.subr.bf16.mxu0 %v1703
        %1968 = vmatpush1.bf16.msra.mxu0 %v1702
        %1969 = vmatprep.subr.bf16.mxu0 %v1705
        %1970 = vmatpush1.bf16.msra.mxu0 %v1704
        %1971 = vmatprep.subr.bf16.mxu0 %v1707
        %1972 = vmatpush1.bf16.msra.mxu0 %v1706
        %1973 = vmatprep.subr.bf16.mxu0 %v1709
        %1974 = vmatpush1.bf16.msra.mxu0 %v1708
        %1975 = vmatprep.mubr.bf16.mxu0 %v1117
        %1976 = vmatmul.mubr.bf16.gmra.mrb[0].mxu0 %v1116
        %v1977 = vpop.f32.mrb[0].mxu0
        %v1978 = vadd.f32 %v1937, %v1977
        %v1979 = vpop.f32.mrb[0].mxu0
        %v1980 = vadd.f32 %v1939, %v1979
        %v1981 = vpop.f32.mrb[0].mxu0
        %v1982 = vpop.f32.mrb[0].mxu0
        %1983 = vdwg.mxu0
        %1984 = vmatprep.subr.bf16.mxu0 %v1711
        %1985 = vmatpush1.bf16.msra.mxu0 %v1710
        %1986 = vmatprep.subr.bf16.mxu0 %v1713
        %1987 = vmatpush1.bf16.msra.mxu0 %v1712
        %1988 = vmatprep.subr.bf16.mxu0 %v1715
        %1989 = vmatpush1.bf16.msra.mxu0 %v1714
        %1990 = vmatprep.subr.bf16.mxu0 %v1717
        %1991 = vmatpush1.bf16.msra.mxu0 %v1716
        %1992 = vmatprep.subr.bf16.mxu0 %v1719
        %1993 = vmatpush1.bf16.msra.mxu0 %v1718
        %1994 = vmatprep.subr.bf16.mxu0 %v1721
        %1995 = vmatpush1.bf16.msra.mxu0 %v1720
        %1996 = vmatprep.subr.bf16.mxu0 %v1723
        %1997 = vmatpush1.bf16.msra.mxu0 %v1722
        %1998 = vmatprep.subr.bf16.mxu0 %v1725
        %1999 = vmatpush1.bf16.msra.mxu0 %v1724
        %2000 = vmatprep.subr.bf16.mxu0 %v1727
        %2001 = vmatpush1.bf16.msra.mxu0 %v1726
        %2002 = vmatprep.subr.bf16.mxu0 %v1729
        %2003 = vmatpush1.bf16.msra.mxu0 %v1728
        %2004 = vmatprep.subr.bf16.mxu0 %v1731
        %2005 = vmatpush1.bf16.msra.mxu0 %v1730
        %2006 = vmatprep.subr.bf16.mxu0 %v1733
        %2007 = vmatpush1.bf16.msra.mxu0 %v1732
        %2008 = vmatprep.subr.bf16.mxu0 %v1735
        %2009 = vmatpush1.bf16.msra.mxu0 %v1734
        %2010 = vmatprep.subr.bf16.mxu0 %v1737
        %2011 = vmatpush1.bf16.msra.mxu0 %v1736
        %2012 = vmatprep.subr.bf16.mxu0 %v1739
        %2013 = vmatpush1.bf16.msra.mxu0 %v1738
        %2014 = vmatprep.subr.bf16.mxu0 %v1741
        %2015 = vmatpush1.bf16.msra.mxu0 %v1740
        %2016 = vmatprep.mubr.bf16.mxu0 %v1119
        %2017 = vmatmul.mubr.bf16.gmra.mrb[0].mxu0 %v1118
        %v2018 = vpop.f32.mrb[0].mxu0
        %v2019 = vadd.f32 %v1978, %v2018
        %v2020 = vpop.f32.mrb[0].mxu0
        %v2021 = vadd.f32 %v1980, %v2020
        %v2022 = vpop.f32.mrb[0].mxu0
        %v2023 = vpop.f32.mrb[0].mxu0
        %2024 = vdwg.mxu0
        %2025 = vmatprep.subr.bf16.mxu0 %v1743
        %2026 = vmatpush1.bf16.msra.mxu0 %v1742
        %2027 = vmatprep.subr.bf16.mxu0 %v1745
        %2028 = vmatpush1.bf16.msra.mxu0 %v1744
        %2029 = vmatprep.subr.bf16.mxu0 %v1747
        %2030 = vmatpush1.bf16.msra.mxu0 %v1746
        %2031 = vmatprep.subr.bf16.mxu0 %v1749
        %2032 = vmatpush1.bf16.msra.mxu0 %v1748
        %2033 = vmatprep.subr.bf16.mxu0 %v1751
        %2034 = vmatpush1.bf16.msra.mxu0 %v1750
        %2035 = vmatprep.subr.bf16.mxu0 %v1753
        %2036 = vmatpush1.bf16.msra.mxu0 %v1752
        %2037 = vmatprep.subr.bf16.mxu0 %v1755
        %2038 = vmatpush1.bf16.msra.mxu0 %v1754
        %2039 = vmatprep.subr.bf16.mxu0 %v1757
        %2040 = vmatpush1.bf16.msra.mxu0 %v1756
        %2041 = vmatprep.subr.bf16.mxu0 %v1759
        %2042 = vmatpush1.bf16.msra.mxu0 %v1758
        %2043 = vmatprep.subr.bf16.mxu0 %v1761
        %2044 = vmatpush1.bf16.msra.mxu0 %v1760
        %2045 = vmatprep.subr.bf16.mxu0 %v1763
        %2046 = vmatpush1.bf16.msra.mxu0 %v1762
        %2047 = vmatprep.subr.bf16.mxu0 %v1765
        %2048 = vmatpush1.bf16.msra.mxu0 %v1764
        %2049 = vmatprep.subr.bf16.mxu0 %v1767
        %2050 = vmatpush1.bf16.msra.mxu0 %v1766
        %2051 = vmatprep.subr.bf16.mxu0 %v1769
        %2052 = vmatpush1.bf16.msra.mxu0 %v1768
        %2053 = vmatprep.subr.bf16.mxu0 %v1771
        %2054 = vmatpush1.bf16.msra.mxu0 %v1770
        %2055 = vmatprep.subr.bf16.mxu0 %v1773
        %2056 = vmatpush1.bf16.msra.mxu0 %v1772
        %2057 = vmatprep.mubr.bf16.mxu0 %v1121
        %2058 = vmatmul.mubr.bf16.gmra.mrb[0].mxu0 %v1120
        %v2059 = vpop.f32.mrb[0].mxu0
        %v2060 = vadd.f32 %v2019, %v2059
        %v2061 = vpop.f32.mrb[0].mxu0
        %v2062 = vadd.f32 %v2021, %v2061
        %v2063 = vpop.f32.mrb[0].mxu0
        %v2064 = vpop.f32.mrb[0].mxu0
        %2065 = vdwg.mxu0
        %v2068 = vcombine.low %v2060, %v2062
        %v2070 = vunpack.c.l.s4 1983009808
        %v2071 = vunpack.c.0.s8 %v2070
        %v2072 = vlaneseq
        %v2073 = vshrl.u32 %v2072, 7
        %v2074 = vsub.s32 %v2071, %v2073
        %v2075 = vrot.slane %v2068, %v2074
        %2077 = vst [vmem:[%s358] sm:$0xf] %v2075
        %s2078 = sand.u32 %s189, 1
        %s2079 = scalar_lea.sflag [#allocation4], %s2078
        %s2080 = sand.u32 %s189, 1
        %s2081 = smul.addr %s2080, 4
        %s2082 = scalar_lea.vmem [#allocation11], %s2081
        // Predicated region
        $region69: #{tpu_custom_call.1} parent=47 // pred_check
          %p2083 = pneg %p199
        $region70: #{tpu_custom_call.1} parent=47 // pred_check_branch
          %2085 = sbr.rel (%p2083) target = $region72
        $region71: #{tpu_custom_call.1} parent=47 // pred_region
          %s2086 = smul.u32 2, %s24
          %s2088 = ssub.s32 64, 64
          %2089 = vsyncadd %s2079, %s2088
          %s2090 = smul.addr %s2086, 32
          %s2091 = scalar_lea.hbm %s7, %s2090
          %s2093 = sshll.u32 %s2082, 4
          %s2094 = int_to_ptr.vmem [resolvable:$true] %s2093
          %2096 = dma.vmem_to_hbm [thread:$0]  %s2094, 64, %s2091, %s2079
        $region72: #{tpu_custom_call.1} parent=47 // pred_fallthru
          _
      $region48: #{tpu_custom_call.1} parent=5 // pred_fallthru
        _
      %p2097 = scmp.le.s32.totalorder 2, %s19
      // Predicated region
      $region73: #{tpu_custom_call.1} parent=5 // pred_check
        %p2098 = pneg %p2097
      $region74: #{tpu_custom_call.1} parent=5 // pred_check_branch
        %2100 = sbr.rel (%p2098) target = $region76
      $region75: #{tpu_custom_call.1} parent=5 // pred_region
        %s2101 = ssub.s32 %s19, 2
        // Predicated region
        $region77: #{tpu_custom_call.1} parent=75 // pred_check
          %p2102 = pneg %p205
        $region78: #{tpu_custom_call.1} parent=75 // pred_check_branch
          %2104 = sbr.rel (%p2102) target = $region80
        $region79: #{tpu_custom_call.1} parent=75 // pred_region
          %s2105 = sand.u32 %s190, 1
          %s2106 = scalar_lea.sflag [#allocation4], %s2105
          %s2107 = sand.u32 %s190, 1
          %s2108 = smul.addr %s2107, 4
          %s2109 = scalar_lea.vmem [#allocation11], %s2108
          %2110 = dma.done %s2106, 64
        $region80: #{tpu_custom_call.1} parent=75 // pred_fallthru
          _
      $region76: #{tpu_custom_call.1} parent=5 // pred_fallthru
        _
    $region6: #{tpu_custom_call.1} parent=1 // loop_footer
      %s23 = sadd.s32 1, %s19
    $region7: #{tpu_custom_call.1} parent=1 // loop_footer_branch
      %18 = sbr.rel target = $region3
    $region8: #{tpu_custom_call.1} parent=1 // loop_exit
      _
    %2111 = vsyncpa [#allocation3], 1
    %s2112 = scalar_lea.sflag [#allocation3], 1
    %2113 = vsyncpa %s2112, 1
    %2114 = vsyncpa [#allocation6], 1
    %2115 = vsyncpa [#allocation9], 1
    %2116 = vsyncpa [#allocation4], 1
    %s2117 = scalar_lea.sflag [#allocation4], 1
    %2118 = vsyncpa %s2117, 1

</llo_original>
